<compile_context>
chip_gen: v6e
topology: v6e:2x2x1
jax: 0.10.0
libtpu: 0.0.40
codegen_flags: <defaults>
</compile_context>

<pallas_src>
import math
from functools import partial

import jax
import jax.numpy as jnp
from jax import lax
from jax.experimental import pallas as pl
from jax.experimental.pallas import tpu as pltpu


# ----------------------------------------------------------------------------
# Plain-JAX glue: relative-position tables, tiny (2->512->H) bias MLP, gather.
# Grid-invariant and gather-heavy, so it stays hoisted outside the kernel.
# ----------------------------------------------------------------------------
def _relative_pos_table(wdw_h, wdw_w, scale):
    ch = jnp.arange(-(wdw_h - 1), wdw_h, dtype=jnp.float32)
    cw = jnp.arange(-(wdw_w - 1), wdw_w, dtype=jnp.float32)
    gh, gw = jnp.meshgrid(ch, cw, indexing="ij")
    coords = jnp.stack([gh, gw], axis=-1)                       # (2h-1, 2w-1, 2)
    coords = coords.at[..., 0].divide(float(wdw_h - 1))
    coords = coords.at[..., 1].divide(float(wdw_w - 1))
    coords = coords * scale
    return (jnp.sign(coords) * jnp.log2(jnp.abs(coords) + 1.0)
            / jnp.log2(jnp.float32(scale)))


def _relative_index(wdw_h, wdw_w):
    gh, gw = jnp.meshgrid(jnp.arange(wdw_h), jnp.arange(wdw_w), indexing="ij")
    coords = jnp.stack([gh.reshape(-1), gw.reshape(-1)], axis=0)   # (2, N)
    rel = coords[:, :, None] - coords[:, None, :]                  # (2, N, N)
    rel = jnp.transpose(rel, (1, 2, 0))                            # (N, N, 2)
    rel = rel.at[:, :, 0].add(wdw_h - 1)
    rel = rel.at[:, :, 1].add(wdw_w - 1)
    rel = rel.at[:, :, 0].multiply(2 * wdw_w - 1)
    return rel.sum(-1).astype(jnp.int32)                           # (N, N)


def _relative_bias(params, wdw_size, n_heads):
    """16*sigmoid(bias-MLP) -> (H, N, N); hoisted out of the kernel body."""
    wdw_h, wdw_w = wdw_size
    n = wdw_h * wdw_w
    rel_pos = _relative_pos_table(wdw_h, wdw_w, scale=8.0)
    hid = jnp.maximum(rel_pos @ params["mlp_w1"] + params["mlp_b1"], 0.0)
    table = (hid @ params["mlp_w2"]).reshape(-1, n_heads)
    gathered = table[_relative_index(wdw_h, wdw_w).reshape(-1)]    # (N*N, H)
    # Literal reproduction of the reference einops
    #   '(H1 H2 W1 W2) H -> 1 H (H1 W1) (H2 W2)'
    b = gathered.reshape(wdw_h, wdw_h, wdw_w, wdw_w, n_heads)
    b = jnp.transpose(b, (4, 0, 2, 1, 3)).reshape(n_heads, n, n)
    return 16.0 * jax.nn.sigmoid(b)                                # (H, N, N)


# ----------------------------------------------------------------------------
# Pallas kernel: fused QKV projection, dense per-head cosine attention with a
# block-diagonal (scale-folded) mask, fused output projection.
# ----------------------------------------------------------------------------
def _window_msa_kernel(e_ref, wqkv_ref, bqkv_ref, wa_ref, ba_ref,
                       smask_ref, bias_ref, out_ref, a_scr,
                       *, n_heads, key_dim, val_dim, cdtype):
    hd_k = n_heads * key_dim

    # Fused Q|K|V projection: one wide MXU matmul, cdtype operands, f32 acc.
    qkv = jnp.dot(e_ref[...], wqkv_ref[...],
                  preferred_element_type=jnp.float32) + bqkv_ref[...]

    # Small static unroll over heads; each head's result is written straight
    # into the VMEM scratch slab so live ranges stay bounded.
    # TODO(synk): the per-head column slices below start at lane offsets that
    # are multiples of key_dim (not 128); pad key/val dims to 128 lanes if a
    # bundle dump shows the resulting relayouts on the critical path.
    for h in range(n_heads):
        q0 = h * key_dim
        k0 = hd_k + h * key_dim
        v0 = 2 * hd_k + h * val_dim
        qh = qkv[:, q0:q0 + key_dim]                                # (M, Dk) f32
        kh = qkv[:, k0:k0 + key_dim]
        vh = qkv[:, v0:v0 + val_dim]                                # (M, Dv) f32

        # F.normalize(dim=-1): x / max(||x||, 1e-12) == x * rsqrt(max(ss, 1e-24))
        qn = qh * lax.rsqrt(
            jnp.maximum(jnp.sum(qh * qh, axis=-1, keepdims=True), 1e-24))
        kn = kh * lax.rsqrt(
            jnp.maximum(jnp.sum(kh * kh, axis=-1, keepdims=True), 1e-24))

        # Dense cosine logits over the whole (M = b_blk*N)-row block: one
        # lane/sublane-full MXU matmul instead of b_blk tiny batched ones.
        p = jnp.einsum('nd,md->nm', qn.astype(cdtype), kn.astype(cdtype),
                       preferred_element_type=jnp.float32)          # (M, M) f32

        # Block-diagonal window mask with exp(clamp(logit_scale)) pre-folded
        # into it, plus the relative-position bias tiled on the diagonal.
        p = p * smask_ref[h] + bias_ref[h]

        # NOTE: the reference contracts V with the raw (un-softmaxed) P; same.
        a_scr[:, h * val_dim:(h + 1) * val_dim] = jnp.dot(
            p.astype(cdtype), vh.astype(cdtype),
            preferred_element_type=jnp.float32)                     # (M, Dv)

    # Fused output projection over all heads (head-major slab matches the
    # reference 'B H N D -> B N (H D)' layout and WA's row order).
    out = jnp.dot(a_scr[...].astype(cdtype), wa_ref[...],
                  preferred_element_type=jnp.float32) + ba_ref[...]
    out_ref[...] = out.astype(out_ref.dtype)


def _choose_batch_block(n_windows, n_tok):
    """Windows per grid step.

    * (b_blk * n_tok) % 8 == 0 -> sublane-aligned row blocks even for odd
      window sizes (7x7 -> N=49); the wrapper pads B with dummy windows.
    * ~128 token rows per step: fills the MXU row dimension of the dense
      attention matmuls; per-step overhead (~0.35us) stays negligible.
    * >=4 grid steps when the batch allows, so each v7x TensorCore gets >=2
      pipelined steps under dimension_semantics=("parallel",) and single-TC
      chips (v5e/v6e) get real prefetch-while-compute.
    """
    align = 8 // math.gcd(n_tok, 8)
    b_blk = max(align, (128 // n_tok) // align * align)
    while b_blk > align and (n_windows + b_blk - 1) // b_blk < 4:
        b_blk -= align
    return b_blk


def window_msa_forward(E, params, wdw_size, n_heads, *,
                       compute_dtype=jnp.bfloat16):
    B, N, C = E.shape
    assert N == wdw_size[0] * wdw_size[1]
    key_dim = val_dim = 3 * C
    hd_k, hd_v = n_heads * key_dim, n_heads * val_dim
    qkv_w = 2 * hd_k + hd_v

    # ---- grid-invariant precompute (hoisted out of the kernel body) ---------
    bias16 = _relative_bias(params, wdw_size, n_heads)               # (H, N, N)
    scales = jnp.exp(jnp.minimum(params["logit_scale"],
                                 math.log(100.0))).reshape(n_heads, 1, 1)

    # Fused [WQ | WK | WV] (WK has no bias).  Matmul operands are pre-cast so
    # the HBM->VMEM DMA already moves compute_dtype bytes; biases stay f32 and
    # are added after the f32 accumulation.
    wqkv = jnp.concatenate([params["wq"], params["wk"], params["wv"]],
                           axis=1).astype(compute_dtype)
    bqkv = jnp.concatenate([params["bq"], jnp.zeros((1, hd_k), jnp.float32),
                            params["bv"]], axis=1)
    wa = params["wa"].astype(compute_dtype)

    # ---- block / grid sizing -------------------------------------------------
    b_blk = _choose_batch_block(B, N)
    n_steps = (B + b_blk - 1) // b_blk
    b_pad = n_steps * b_blk
    m_blk = b_blk * N
    if b_pad != B:                    # pad with dummy windows -> full blocks
        E = jnp.concatenate([E, jnp.zeros((b_pad - B, N, C), E.dtype)], axis=0)
    e2d = E.reshape(b_pad * N, C).astype(compute_dtype)

    # Block-diagonal tables for dense-with-mask attention (grid-invariant):
    #   scalemask = exp(clamp(logit_scale)) on the diagonal window blocks,
    #   bias_diag = 16*sigmoid(rel-pos MLP) tiled on the diagonal blocks.
    # NOTE: for real Swin sizes these are O(H * m_blk^2) f32 -> re-derive
    # b_blk against v7x's 64 MiB VMEM before scaling up.
    eye = jnp.eye(b_blk, dtype=jnp.float32)
    scalemask = scales * jnp.kron(eye, jnp.ones((N, N), jnp.float32))[None]
    bias_diag = jax.vmap(lambda b: jnp.kron(eye, b))(bias16)        # (H, M, M)

    kernel = partial(_window_msa_kernel, n_heads=n_heads, key_dim=key_dim,
                     val_dim=val_dim, cdtype=compute_dtype)

    itemsize = jnp.finfo(compute_dtype).bits // 8
    m_total = b_pad * N
    cost = pl.CostEstimate(
        flops=(2 * m_total * C * qkv_w                               # fused QKV
               + 2 * n_heads * m_total * m_blk * (key_dim + val_dim)  # attention
               + 2 * m_total * hd_v * C),                            # projection
        transcendentals=2 * n_heads * m_total,                       # rsqrt per row
        bytes_accessed=((m_total * C + C * qkv_w + hd_v * C) * itemsize
                        + (qkv_w + C) * 4
                        + 2 * n_heads * m_blk * m_blk * 4
                        + m_total * C * 4))

    grid_spec = pltpu.PrefetchScalarGridSpec(
        num_scalar_prefetch=0,
        grid=(n_steps,),
        in_specs=[
            pl.BlockSpec((m_blk, C), lambda i: (i, 0)),              # E token rows
            pl.BlockSpec((C, qkv_w), lambda i: (0, 0)),              # fused W_qkv
            pl.BlockSpec((1, qkv_w), lambda i: (0, 0)),              # fused b_qkv
            pl.BlockSpec((hd_v, C), lambda i: (0, 0)),               # WA
            pl.BlockSpec((1, C), lambda i: (0, 0)),                  # bA
            pl.BlockSpec((n_heads, m_blk, m_blk), lambda i: (0, 0, 0)),  # scale*mask
            pl.BlockSpec((n_heads, m_blk, m_blk), lambda i: (0, 0, 0)),  # bias diag
        ],
        out_specs=pl.BlockSpec((m_blk, C), lambda i: (i, 0)),        # token rows
        scratch_shapes=[pltpu.VMEM((m_blk, hd_v), jnp.float32)],     # per-head A slab
    )

    out = pl.pallas_call(
        kernel,
        out_shape=jax.ShapeDtypeStruct((b_pad * N, C), jnp.float32),
        grid_spec=grid_spec,
        compiler_params=pltpu.CompilerParams(
            dimension_semantics=("parallel",),
            vmem_limit_bytes=32 * 1024 * 1024),
        cost_estimate=cost,
    )(e2d, wqkv, bqkv, wa, params["ba"], scalemask, bias_diag)

    return out[:B * N].reshape(B, N, C)


# ----------------------------------------------------------------------------
# Pure-JAX reference (exact transcription of WindowMSA.forward, mask=None).
# ----------------------------------------------------------------------------
def _reference_forward(E, params, wdw_size, n_heads):
    B, N, C = E.shape
    kd = vd = 3 * C
    q = E @ params["wq"] + params["bq"]
    k = E @ params["wk"]
    v = E @ params["wv"] + params["bv"]
    split = lambda x, d: jnp.transpose(x.reshape(B, N, n_heads, d), (0, 2, 1, 3))
    q, k, v = split(q, kd), split(k, kd), split(v, vd)              # (B, H, N, D)
    q = q / jnp.maximum(jnp.sqrt(jnp.sum(q * q, -1, keepdims=True)), 1e-12)
    k = k / jnp.maximum(jnp.sqrt(jnp.sum(k * k, -1, keepdims=True)), 1e-12)
    p = jnp.einsum('bhnd,bhmd->bhnm', q, k)
    p = p * jnp.exp(jnp.minimum(params["logit_scale"], math.log(100.0)))[None]
    p = p + _relative_bias(params, wdw_size, n_heads)[None]
    a = jnp.einsum('bhnm,bhmd->bhnd', p, v)      # raw P, matching the module
    a = jnp.transpose(a, (0, 2, 1, 3)).reshape(B, N, n_heads * vd)
    return a @ params["wa"] + params["ba"]


# ----------------------------------------------------------------------------
# Deterministic synthetic parameter init (shapes from WindowMSA.__init__).
# ----------------------------------------------------------------------------
def init_params(key, in_dim, n_heads):
    key_dim = val_dim = 3 * in_dim
    ks = jax.random.split(key, 10)
    init = lambda k, shape: jax.random.normal(k, shape, jnp.float32) * 0.05
    return dict(
        wq=init(ks[0], (in_dim, n_heads * key_dim)),
        bq=init(ks[1], (1, n_heads * key_dim)),
        wk=init(ks[2], (in_dim, n_heads * key_dim)),
        wv=init(ks[3], (in_dim, n_heads * val_dim)),
        bv=init(ks[4], (1, n_heads * val_dim)),
        wa=init(ks[5], (n_heads * val_dim, in_dim)),
        ba=init(ks[6], (1, in_dim)),
        mlp_w1=init(ks[7], (2, 512)),
        mlp_b1=jnp.zeros((512,), jnp.float32),
        mlp_w2=init(ks[8], (512, n_heads)),
        # logit_scale = log(10 * (rand(H,1,1) + 1))
        logit_scale=jnp.log(
            10.0 * (jax.random.uniform(ks[9], (n_heads, 1, 1), jnp.float32) + 1.0)),
    )


if __name__ == "__main__":
    key = jax.random.PRNGKey(0)
    kp, ke = jax.random.split(key)

    in_dim = 8
    n_heads = 2
    wdw_size = (4, 4)                 # N = 16 tokens per window
    n_windows = 64                    # batch*num_windows; b_blk=8 -> grid=(8,)
    N = wdw_size[0] * wdw_size[1]

    params = init_params(kp, in_dim, n_heads)
    E = jax.random.normal(ke, (n_windows, N, in_dim), jnp.float32)

    ref = jax.block_until_ready(_reference_forward(E, params, wdw_size, n_heads))
    ref_scale = float(jnp.max(jnp.abs(ref)))
    tol = 5e-2 * ref_scale + 1e-3     # bound sized for bf16 MXU operands

    # Fast path: bf16 MXU operands, f32 accumulation (per perf review).
    fwd_bf16 = jax.jit(partial(window_msa_forward, wdw_size=wdw_size,
                               n_heads=n_heads, compute_dtype=jnp.bfloat16))
    out_bf16 = jax.block_until_ready(fwd_bf16(E, params))
    assert out_bf16.shape == (n_windows, N, in_dim)
    assert out_bf16.dtype == jnp.float32
    err_bf16 = float(jnp.max(jnp.abs(out_bf16 - ref)))
    assert err_bf16 <= tol, "bf16 path: max abs err %f (bound %f)" % (err_bf16, tol)

    # Parity configuration: f32 MXU operands (typically ~1e-5 max abs err).
    fwd_f32 = jax.jit(partial(window_msa_forward, wdw_size=wdw_size,
                              n_heads=n_heads, compute_dtype=jnp.float32))
    out_f32 = jax.block_until_ready(fwd_f32(E, params))
    err_f32 = float(jnp.max(jnp.abs(out_f32 - ref)))
    assert err_f32 <= tol, "f32 path: max abs err %f (bound %f)" % (err_f32, tol)

    print("KERNEL_OK")
</pallas_src>

<mosaic_0001>
module attributes {stable_mosaic.version = 11 : i64} {
  func.func @_window_msa_kernel(%arg0: i32, %arg1: memref<128x8xbf16, #tpu.memory_space<vmem>>, %arg2: memref<8x144xbf16, #tpu.memory_space<vmem>>, %arg3: memref<1x144xf32, #tpu.memory_space<vmem>>, %arg4: memref<48x8xbf16, #tpu.memory_space<vmem>>, %arg5: memref<1x8xf32, #tpu.memory_space<vmem>>, %arg6: memref<2x128x128xf32, #tpu.memory_space<vmem>>, %arg7: memref<2x128x128xf32, #tpu.memory_space<vmem>>, %arg8: memref<128x8xf32, #tpu.memory_space<vmem>>, %arg9: memref<128x48xf32, #tpu.memory_space<vmem>>) attributes {dimension_semantics = [#tpu.dimension_semantics<parallel>], iteration_bounds = array<i64: 8>, scalar_prefetch = 0 : i64, scratch_operands = 1 : i64, tpu.core_type = #tpu.core_type<tc>, window_params = [{transform_indices = @transform_0, window_bounds = array<i64: 128, 8>}, {pipeline_mode = #tpu.pipeline_mode<synchronous>, transform_indices = @transform_1, window_bounds = array<i64: 8, 144>}, {pipeline_mode = #tpu.pipeline_mode<synchronous>, transform_indices = @transform_2, window_bounds = array<i64: 1, 144>}, {pipeline_mode = #tpu.pipeline_mode<synchronous>, transform_indices = @transform_3, window_bounds = array<i64: 48, 8>}, {pipeline_mode = #tpu.pipeline_mode<synchronous>, transform_indices = @transform_4, window_bounds = array<i64: 1, 8>}, {pipeline_mode = #tpu.pipeline_mode<synchronous>, transform_indices = @transform_5, window_bounds = array<i64: 2, 128, 128>}, {pipeline_mode = #tpu.pipeline_mode<synchronous>, transform_indices = @transform_6, window_bounds = array<i64: 2, 128, 128>}, {transform_indices = @transform_7, window_bounds = array<i64: 128, 8>}]} {
    %c0 = arith.constant 0 : index
    %c0_0 = arith.constant 0 : index
    %0 = vector.load %arg1[%c0, %c0_0] : memref<128x8xbf16, #tpu.memory_space<vmem>>, vector<128x8xbf16>
    %c0_1 = arith.constant 0 : index
    %c0_2 = arith.constant 0 : index
    %1 = vector.load %arg2[%c0_1, %c0_2] : memref<8x144xbf16, #tpu.memory_space<vmem>>, vector<8x144xbf16>
    %cst = arith.constant dense<0.000000e+00> : vector<128x144xf32>
    %2 = tpu.matmul %0, %1, %cst {dimension_numbers = #tpu.dot_dimension_numbers<[1], [0], [0], [1], [0, 0, 1, 1], [], []>} : vector<128x8xbf16>, vector<8x144xbf16>, vector<128x144xf32> -> vector<128x144xf32>
    %c0_3 = arith.constant 0 : index
    %c0_4 = arith.constant 0 : index
    %3 = vector.load %arg3[%c0_3, %c0_4] : memref<1x144xf32, #tpu.memory_space<vmem>>, vector<1x144xf32>
    %4 = vector.broadcast %3 : vector<1x144xf32> to vector<128x144xf32>
    %5 = arith.addf %2, %4 : vector<128x144xf32>
    %6 = vector.extract_strided_slice %5 {offsets = [0, 0], sizes = [128, 24], strides = [1, 1]} : vector<128x144xf32> to vector<128x24xf32>
    %7 = vector.extract_strided_slice %5 {offsets = [0, 48], sizes = [128, 24], strides = [1, 1]} : vector<128x144xf32> to vector<128x24xf32>
    %8 = vector.extract_strided_slice %5 {offsets = [0, 96], sizes = [128, 24], strides = [1, 1]} : vector<128x144xf32> to vector<128x24xf32>
    %9 = arith.mulf %6, %6 : vector<128x24xf32>
    %cst_5 = arith.constant dense<0.000000e+00> : vector<128xf32>
    %10 = vector.multi_reduction <add>, %9, %cst_5 [1] : vector<128x24xf32> to vector<128xf32>
    %11 = vector.shape_cast %10 : vector<128xf32> to vector<128x1xf32>
    %cst_6 = arith.constant 1.000000e-24 : f32
    %12 = vector.broadcast %cst_6 : f32 to vector<128x1xf32>
    %13 = arith.maximumf %11, %12 : vector<128x1xf32>
    %14 = math.rsqrt %13 : vector<128x1xf32>
    %15 = vector.broadcast %14 : vector<128x1xf32> to vector<128x24xf32>
    %16 = arith.mulf %6, %15 : vector<128x24xf32>
    %17 = arith.mulf %7, %7 : vector<128x24xf32>
    %cst_7 = arith.constant dense<0.000000e+00> : vector<128xf32>
    %18 = vector.multi_reduction <add>, %17, %cst_7 [1] : vector<128x24xf32> to vector<128xf32>
    %19 = vector.shape_cast %18 : vector<128xf32> to vector<128x1xf32>
    %cst_8 = arith.constant 1.000000e-24 : f32
    %20 = vector.broadcast %cst_8 : f32 to vector<128x1xf32>
    %21 = arith.maximumf %19, %20 : vector<128x1xf32>
    %22 = math.rsqrt %21 : vector<128x1xf32>
    %23 = vector.broadcast %22 : vector<128x1xf32> to vector<128x24xf32>
    %24 = arith.mulf %7, %23 : vector<128x24xf32>
    %25 = arith.truncf %16 : vector<128x24xf32> to vector<128x24xbf16>
    %26 = arith.truncf %24 : vector<128x24xf32> to vector<128x24xbf16>
    "tpu.trace_start"() <{level = 10 : i32, message = "nd,md->nm"}> : () -> ()
    %cst_9 = arith.constant dense<0.000000e+00> : vector<128x128xf32>
    %27 = tpu.matmul %25, %26, %cst_9 {dimension_numbers = #tpu.dot_dimension_numbers<[1], [1], [0], [0], [0, 0, 1, 0], [], []>} : vector<128x24xbf16>, vector<128x24xbf16>, vector<128x128xf32> -> vector<128x128xf32>
    "tpu.trace_stop"() : () -> ()
    %c0_10 = arith.constant 0 : index
    %c0_11 = arith.constant 0 : index
    %c0_12 = arith.constant 0 : index
    %28 = vector.load %arg6[%c0_10, %c0_11, %c0_12] : memref<2x128x128xf32, #tpu.memory_space<vmem>>, vector<1x128x128xf32>
    %29 = vector.shape_cast %28 : vector<1x128x128xf32> to vector<128x128xf32>
    %30 = arith.mulf %27, %29 : vector<128x128xf32>
    %c0_13 = arith.constant 0 : index
    %c0_14 = arith.constant 0 : index
    %c0_15 = arith.constant 0 : index
    %31 = vector.load %arg7[%c0_13, %c0_14, %c0_15] : memref<2x128x128xf32, #tpu.memory_space<vmem>>, vector<1x128x128xf32>
    %32 = vector.shape_cast %31 : vector<1x128x128xf32> to vector<128x128xf32>
    %33 = arith.addf %30, %32 : vector<128x128xf32>
    %34 = arith.truncf %33 : vector<128x128xf32> to vector<128x128xbf16>
    %35 = arith.truncf %8 : vector<128x24xf32> to vector<128x24xbf16>
    %cst_16 = arith.constant dense<0.000000e+00> : vector<128x24xf32>
    %36 = tpu.matmul %34, %35, %cst_16 {dimension_numbers = #tpu.dot_dimension_numbers<[1], [0], [0], [1], [0, 0, 1, 1], [], []>} : vector<128x128xbf16>, vector<128x24xbf16>, vector<128x24xf32> -> vector<128x24xf32>
    %c0_17 = arith.constant 0 : index
    %c0_18 = arith.constant 0 : index
    %37 = vector.load %arg9[%c0_17, %c0_18] : memref<128x48xf32, #tpu.memory_space<vmem>>, vector<128x24xf32>
    tpu.vector_store %arg9[%c0_17, %c0_18], %36 {strides = array<i32>} : memref<128x48xf32, #tpu.memory_space<vmem>>, vector<128x24xf32>,
    %38 = vector.extract_strided_slice %5 {offsets = [0, 24], sizes = [128, 24], strides = [1, 1]} : vector<128x144xf32> to vector<128x24xf32>
    %39 = vector.extract_strided_slice %5 {offsets = [0, 72], sizes = [128, 24], strides = [1, 1]} : vector<128x144xf32> to vector<128x24xf32>
    %40 = vector.extract_strided_slice %5 {offsets = [0, 120], sizes = [128, 24], strides = [1, 1]} : vector<128x144xf32> to vector<128x24xf32>
    %41 = arith.mulf %38, %38 : vector<128x24xf32>
    %cst_19 = arith.constant dense<0.000000e+00> : vector<128xf32>
    %42 = vector.multi_reduction <add>, %41, %cst_19 [1] : vector<128x24xf32> to vector<128xf32>
    %43 = vector.shape_cast %42 : vector<128xf32> to vector<128x1xf32>
    %cst_20 = arith.constant 1.000000e-24 : f32
    %44 = vector.broadcast %cst_20 : f32 to vector<128x1xf32>
    %45 = arith.maximumf %43, %44 : vector<128x1xf32>
    %46 = math.rsqrt %45 : vector<128x1xf32>
    %47 = vector.broadcast %46 : vector<128x1xf32> to vector<128x24xf32>
    %48 = arith.mulf %38, %47 : vector<128x24xf32>
    %49 = arith.mulf %39, %39 : vector<128x24xf32>
    %cst_21 = arith.constant dense<0.000000e+00> : vector<128xf32>
    %50 = vector.multi_reduction <add>, %49, %cst_21 [1] : vector<128x24xf32> to vector<128xf32>
    %51 = vector.shape_cast %50 : vector<128xf32> to vector<128x1xf32>
    %cst_22 = arith.constant 1.000000e-24 : f32
    %52 = vector.broadcast %cst_22 : f32 to vector<128x1xf32>
    %53 = arith.maximumf %51, %52 : vector<128x1xf32>
    %54 = math.rsqrt %53 : vector<128x1xf32>
    %55 = vector.broadcast %54 : vector<128x1xf32> to vector<128x24xf32>
    %56 = arith.mulf %39, %55 : vector<128x24xf32>
    %57 = arith.truncf %48 : vector<128x24xf32> to vector<128x24xbf16>
    %58 = arith.truncf %56 : vector<128x24xf32> to vector<128x24xbf16>
    "tpu.trace_start"() <{level = 10 : i32, message = "nd,md->nm"}> : () -> ()
    %cst_23 = arith.constant dense<0.000000e+00> : vector<128x128xf32>
    %59 = tpu.matmul %57, %58, %cst_23 {dimension_numbers = #tpu.dot_dimension_numbers<[1], [1], [0], [0], [0, 0, 1, 0], [], []>} : vector<128x24xbf16>, vector<128x24xbf16>, vector<128x128xf32> -> vector<128x128xf32>
    "tpu.trace_stop"() : () -> ()
    %c1 = arith.constant 1 : index
    %c0_24 = arith.constant 0 : index
    %c0_25 = arith.constant 0 : index
    %60 = vector.load %arg6[%c1, %c0_24, %c0_25] : memref<2x128x128xf32, #tpu.memory_space<vmem>>, vector<1x128x128xf32>
    %61 = vector.shape_cast %60 : vector<1x128x128xf32> to vector<128x128xf32>
    %62 = arith.mulf %59, %61 : vector<128x128xf32>
    %c1_26 = arith.constant 1 : index
    %c0_27 = arith.constant 0 : index
    %c0_28 = arith.constant 0 : index
    %63 = vector.load %arg7[%c1_26, %c0_27, %c0_28] : memref<2x128x128xf32, #tpu.memory_space<vmem>>, vector<1x128x128xf32>
    %64 = vector.shape_cast %63 : vector<1x128x128xf32> to vector<128x128xf32>
    %65 = arith.addf %62, %64 : vector<128x128xf32>
    %66 = arith.truncf %65 : vector<128x128xf32> to vector<128x128xbf16>
    %67 = arith.truncf %40 : vector<128x24xf32> to vector<128x24xbf16>
    %cst_29 = arith.constant dense<0.000000e+00> : vector<128x24xf32>
    %68 = tpu.matmul %66, %67, %cst_29 {dimension_numbers = #tpu.dot_dimension_numbers<[1], [0], [0], [1], [0, 0, 1, 1], [], []>} : vector<128x128xbf16>, vector<128x24xbf16>, vector<128x24xf32> -> vector<128x24xf32>
    %c0_30 = arith.constant 0 : index
    %c24 = arith.constant 24 : index
    %69 = vector.load %arg9[%c0_30, %c24] : memref<128x48xf32, #tpu.memory_space<vmem>>, vector<128x24xf32>
    tpu.vector_store %arg9[%c0_30, %c24], %68 {strides = array<i32>} : memref<128x48xf32, #tpu.memory_space<vmem>>, vector<128x24xf32>,
    %c0_31 = arith.constant 0 : index
    %c0_32 = arith.constant 0 : index
    %70 = vector.load %arg9[%c0_31, %c0_32] : memref<128x48xf32, #tpu.memory_space<vmem>>, vector<128x48xf32>
    %71 = arith.truncf %70 : vector<128x48xf32> to vector<128x48xbf16>
    %c0_33 = arith.constant 0 : index
    %c0_34 = arith.constant 0 : index
    %72 = vector.load %arg4[%c0_33, %c0_34] : memref<48x8xbf16, #tpu.memory_space<vmem>>, vector<48x8xbf16>
    %cst_35 = arith.constant dense<0.000000e+00> : vector<128x8xf32>
    %73 = tpu.matmul %71, %72, %cst_35 {dimension_numbers = #tpu.dot_dimension_numbers<[1], [0], [0], [1], [0, 0, 1, 1], [], []>} : vector<128x48xbf16>, vector<48x8xbf16>, vector<128x8xf32> -> vector<128x8xf32>
    %c0_36 = arith.constant 0 : index
    %c0_37 = arith.constant 0 : index
    %74 = vector.load %arg5[%c0_36, %c0_37] : memref<1x8xf32, #tpu.memory_space<vmem>>, vector<1x8xf32>
    %75 = vector.broadcast %74 : vector<1x8xf32> to vector<128x8xf32>
    %76 = arith.addf %73, %75 : vector<128x8xf32>
    %c0_38 = arith.constant 0 : index
    %c0_39 = arith.constant 0 : index
    %77 = vector.load %arg8[%c0_38, %c0_39] : memref<128x8xf32, #tpu.memory_space<vmem>>, vector<128x8xf32>
    tpu.vector_store %arg8[%c0_38, %c0_39], %76 {strides = array<i32>} : memref<128x8xf32, #tpu.memory_space<vmem>>, vector<128x8xf32>,
    return
  }
  func.func @transform_0(%arg0: i32) -> (i32, i32) {
    %c0_i32 = arith.constant 0 : i32
    %c0_i32_0 = arith.constant 0 : i32
    return %arg0, %c0_i32 : i32, i32
  }
  func.func @transform_1(%arg0: i32) -> (i32, i32) {
    %c0_i32 = arith.constant 0 : i32
    %c0_i32_0 = arith.constant 0 : i32
    %c0_i32_1 = arith.constant 0 : i32
    return %c0_i32, %c0_i32_0 : i32, i32
  }
  func.func @transform_2(%arg0: i32) -> (i32, i32) {
    %c0_i32 = arith.constant 0 : i32
    %c0_i32_0 = arith.constant 0 : i32
    %c0_i32_1 = arith.constant 0 : i32
    return %c0_i32, %c0_i32_0 : i32, i32
  }
  func.func @transform_3(%arg0: i32) -> (i32, i32) {
    %c0_i32 = arith.constant 0 : i32
    %c0_i32_0 = arith.constant 0 : i32
    %c0_i32_1 = arith.constant 0 : i32
    return %c0_i32, %c0_i32_0 : i32, i32
  }
  func.func @transform_4(%arg0: i32) -> (i32, i32) {
    %c0_i32 = arith.constant 0 : i32
    %c0_i32_0 = arith.constant 0 : i32
    %c0_i32_1 = arith.constant 0 : i32
    return %c0_i32, %c0_i32_0 : i32, i32
  }
  func.func @transform_5(%arg0: i32) -> (i32, i32, i32) {
    %c0_i32 = arith.constant 0 : i32
    %c0_i32_0 = arith.constant 0 : i32
    %c0_i32_1 = arith.constant 0 : i32
    %c0_i32_2 = arith.constant 0 : i32
    return %c0_i32, %c0_i32_0, %c0_i32_1 : i32, i32, i32
  }
  func.func @transform_6(%arg0: i32) -> (i32, i32, i32) {
    %c0_i32 = arith.constant 0 : i32
    %c0_i32_0 = arith.constant 0 : i32
    %c0_i32_1 = arith.constant 0 : i32
    %c0_i32_2 = arith.constant 0 : i32
    return %c0_i32, %c0_i32_0, %c0_i32_1 : i32, i32, i32
  }
  func.func @transform_7(%arg0: i32) -> (i32, i32) {
    %c0_i32 = arith.constant 0 : i32
    %c0_i32_0 = arith.constant 0 : i32
    return %arg0, %c0_i32 : i32, i32
  }
}

</mosaic_0001>

<llo_original>
// kernel: window_msa_forward.1
$region0: #{window_msa_forward.1}
  #allocation0 [shape = 'u32[]', space=smem, size = 0x4, offset = 0x4, fixed_abs, tag = 'smem constant byte address 0x4 - core index']
  #allocation1 [shape = 'u32[144,128]{1,0:T(1,128)}', space=vmem, size = 0x12000, scoped, tag = 'internal scratch']
  #allocation2 [shape = 'f32[128,48]{1,0:T(8,128)}', space=vmem, size = 0x10000, scoped, tag = 'scratch operand']
  %s0 = inlined_call_operand.vmem [shape: bf16[1024,8], index: 0, kind: input, shape index: {}]
  %s1 = inlined_call_operand.vmem [shape: bf16[8,144], index: 1, kind: input, shape index: {}]
  %s2 = inlined_call_operand.vmem [shape: f32[1,144], index: 2, kind: input, shape index: {}]
  %s3 = inlined_call_operand.vmem [shape: bf16[48,8], index: 3, kind: input, shape index: {}]
  %s4 = inlined_call_operand.vmem [shape: f32[1,8], index: 4, kind: input, shape index: {}]
  %s5 = inlined_call_operand.vmem [shape: f32[2,128,128], index: 5, kind: input, shape index: {}]
  %s6 = inlined_call_operand.vmem [shape: f32[2,128,128], index: 6, kind: input, shape index: {}]
  %s7 = inlined_call_operand.vmem [shape: f32[1024,8], index: 7, kind: output, shape index: {}]
  %s8 = sld [smem:[#allocation0]]
  $region61: #{window_msa_forward.1} parent=0
    _
  %s10 = ssub.s32 1, %s8
  %s11 = scalar_select 0, %s10, %s8
  loop: start=0, step=1, limit=10
  $region2: #{window_msa_forward.1} parent=0 // loop_pre_header
    _
  $region3: #{window_msa_forward.1} parent=0 // loop_header
    %s13 = sphi 0, %s17
    %p14 = scmp.ge.s32.totalorder %s13, 10
    %s23 = sphi 0, %s25
    %s26 = sphi 0, %s23
    %s27 = sphi 0, %s26
    %s43 = sphi 0, %s27
    %s47 = sphi 0, %s47
    %s49 = sphi 0, %s47
    %s50 = sphi 0, %s49
    %s64 = sphi 0, %s50
    %s68 = sphi 0, %s68
    %s70 = sphi 0, %s68
    %s71 = sphi 0, %s70
    %s85 = sphi 0, %s71
    %s89 = sphi 0, %s89
    %s91 = sphi 0, %s89
    %s92 = sphi 0, %s91
    %s106 = sphi 0, %s92
    %s110 = sphi 0, %s110
    %s112 = sphi 0, %s110
    %s113 = sphi 0, %s112
    %s127 = sphi 0, %s113
    %s131 = sphi 0, %s131
    %s133 = sphi 0, %s131
    %s134 = sphi 0, %s133
    %s148 = sphi 0, %s134
    %s152 = sphi 0, %s152
    %s154 = sphi 0, %s152
    %s155 = sphi 0, %s154
    %s169 = sphi 0, %s155
    %s175 = sphi 0, %s177
    %s178 = sphi 0, %s175
    %s179 = sphi 0, %s178
    %s195 = sphi 0, %s179
  $region4: #{window_msa_forward.1} parent=0 // loop_header_branch
    %16 = sbr.rel (%p14) target = $region8
  $region5: #{window_msa_forward.1} parent=0 // loop_body
    %s18 = ssub.s32 %s13, 1
    %s19 = ssub.s32 %s13, 2
    %s20 = sadd.s32 %s13, 1
    %s21 = ssub.s32 %s13, %s20
    %p22 = scmp.eq.s32.totalorder %s21, 0
    %s24 = sadd.s32 %s23, 1
    %s25 = scalar_select %p22, %s23, %s24
    %p28 = pneg %p22
    %p29 = scmp.eq.s32.totalorder %s13, 7
    %p30 = por %p28, %p29
    %p31 = scmp.ne.s32.totalorder %s23, %s26
    %p32 = scmp.eq.s32.totalorder %s13, 0
    %p33 = por %p31, %p32
    %p34 = scmp.ne.s32.totalorder %s23, %s26
    %p35 = scmp.eq.s32.totalorder %s18, 7
    %p36 = por %p34, %p35
    %p37 = scmp.ne.s32.totalorder %s26, %s27
    %p38 = scmp.eq.s32.totalorder %s18, 0
    %p39 = por %p37, %p38
    %p40 = scmp.ne.s32.totalorder %s26, %s27
    %p41 = scmp.eq.s32.totalorder %s19, 7
    %p42 = por %p40, %p41
    %p44 = scmp.ne.s32.totalorder %s27, %s43
    %p45 = scmp.eq.s32.totalorder %s19, 0
    %p46 = por %p44, %p45
    %s48 = sadd.s32 %s47, 1
    %p51 = scmp.eq.s32.totalorder %s13, 7
    %p52 = scmp.ne.s32.totalorder %s47, %s49
    %p53 = scmp.eq.s32.totalorder %s13, 0
    %p54 = por %p52, %p53
    %p55 = scmp.ne.s32.totalorder %s47, %s49
    %p56 = scmp.eq.s32.totalorder %s18, 7
    %p57 = por %p55, %p56
    %p58 = scmp.ne.s32.totalorder %s49, %s50
    %p59 = scmp.eq.s32.totalorder %s18, 0
    %p60 = por %p58, %p59
    %p61 = scmp.ne.s32.totalorder %s49, %s50
    %p62 = scmp.eq.s32.totalorder %s19, 7
    %p63 = por %p61, %p62
    %p65 = scmp.ne.s32.totalorder %s50, %s64
    %p66 = scmp.eq.s32.totalorder %s19, 0
    %p67 = por %p65, %p66
    %s69 = sadd.s32 %s68, 1
    %p72 = scmp.eq.s32.totalorder %s13, 7
    %p73 = scmp.ne.s32.totalorder %s68, %s70
    %p74 = scmp.eq.s32.totalorder %s13, 0
    %p75 = por %p73, %p74
    %p76 = scmp.ne.s32.totalorder %s68, %s70
    %p77 = scmp.eq.s32.totalorder %s18, 7
    %p78 = por %p76, %p77
    %p79 = scmp.ne.s32.totalorder %s70, %s71
    %p80 = scmp.eq.s32.totalorder %s18, 0
    %p81 = por %p79, %p80
    %p82 = scmp.ne.s32.totalorder %s70, %s71
    %p83 = scmp.eq.s32.totalorder %s19, 7
    %p84 = por %p82, %p83
    %p86 = scmp.ne.s32.totalorder %s71, %s85
    %p87 = scmp.eq.s32.totalorder %s19, 0
    %p88 = por %p86, %p87
    %s90 = sadd.s32 %s89, 1
    %p93 = scmp.eq.s32.totalorder %s13, 7
    %p94 = scmp.ne.s32.totalorder %s89, %s91
    %p95 = scmp.eq.s32.totalorder %s13, 0
    %p96 = por %p94, %p95
    %p97 = scmp.ne.s32.totalorder %s89, %s91
    %p98 = scmp.eq.s32.totalorder %s18, 7
    %p99 = por %p97, %p98
    %p100 = scmp.ne.s32.totalorder %s91, %s92
    %p101 = scmp.eq.s32.totalorder %s18, 0
    %p102 = por %p100, %p101
    %p103 = scmp.ne.s32.totalorder %s91, %s92
    %p104 = scmp.eq.s32.totalorder %s19, 7
    %p105 = por %p103, %p104
    %p107 = scmp.ne.s32.totalorder %s92, %s106
    %p108 = scmp.eq.s32.totalorder %s19, 0
    %p109 = por %p107, %p108
    %s111 = sadd.s32 %s110, 1
    %p114 = scmp.eq.s32.totalorder %s13, 7
    %p115 = scmp.ne.s32.totalorder %s110, %s112
    %p116 = scmp.eq.s32.totalorder %s13, 0
    %p117 = por %p115, %p116
    %p118 = scmp.ne.s32.totalorder %s110, %s112
    %p119 = scmp.eq.s32.totalorder %s18, 7
    %p120 = por %p118, %p119
    %p121 = scmp.ne.s32.totalorder %s112, %s113
    %p122 = scmp.eq.s32.totalorder %s18, 0
    %p123 = por %p121, %p122
    %p124 = scmp.ne.s32.totalorder %s112, %s113
    %p125 = scmp.eq.s32.totalorder %s19, 7
    %p126 = por %p124, %p125
    %p128 = scmp.ne.s32.totalorder %s113, %s127
    %p129 = scmp.eq.s32.totalorder %s19, 0
    %p130 = por %p128, %p129
    %s132 = sadd.s32 %s131, 1
    %p135 = scmp.eq.s32.totalorder %s13, 7
    %p136 = scmp.ne.s32.totalorder %s131, %s133
    %p137 = scmp.eq.s32.totalorder %s13, 0
    %p138 = por %p136, %p137
    %p139 = scmp.ne.s32.totalorder %s131, %s133
    %p140 = scmp.eq.s32.totalorder %s18, 7
    %p141 = por %p139, %p140
    %p142 = scmp.ne.s32.totalorder %s133, %s134
    %p143 = scmp.eq.s32.totalorder %s18, 0
    %p144 = por %p142, %p143
    %p145 = scmp.ne.s32.totalorder %s133, %s134
    %p146 = scmp.eq.s32.totalorder %s19, 7
    %p147 = por %p145, %p146
    %p149 = scmp.ne.s32.totalorder %s134, %s148
    %p150 = scmp.eq.s32.totalorder %s19, 0
    %p151 = por %p149, %p150
    %s153 = sadd.s32 %s152, 1
    %p156 = scmp.eq.s32.totalorder %s13, 7
    %p157 = scmp.ne.s32.totalorder %s152, %s154
    %p158 = scmp.eq.s32.totalorder %s13, 0
    %p159 = por %p157, %p158
    %p160 = scmp.ne.s32.totalorder %s152, %s154
    %p161 = scmp.eq.s32.totalorder %s18, 7
    %p162 = por %p160, %p161
    %p163 = scmp.ne.s32.totalorder %s154, %s155
    %p164 = scmp.eq.s32.totalorder %s18, 0
    %p165 = por %p163, %p164
    %p166 = scmp.ne.s32.totalorder %s154, %s155
    %p167 = scmp.eq.s32.totalorder %s19, 7
    %p168 = por %p166, %p167
    %p170 = scmp.ne.s32.totalorder %s155, %s169
    %p171 = scmp.eq.s32.totalorder %s19, 0
    %p172 = por %p170, %p171
    %s173 = ssub.s32 %s13, %s20
    %p174 = scmp.eq.s32.totalorder %s173, 0
    %s176 = sadd.s32 %s175, 1
    %s177 = scalar_select %p174, %s175, %s176
    %p180 = pneg %p174
    %p181 = scmp.eq.s32.totalorder %s13, 7
    %p182 = por %p180, %p181
    %p183 = scmp.ne.s32.totalorder %s175, %s178
    %p184 = scmp.eq.s32.totalorder %s13, 0
    %p185 = por %p183, %p184
    %p186 = scmp.ne.s32.totalorder %s175, %s178
    %p187 = scmp.eq.s32.totalorder %s18, 7
    %p188 = por %p186, %p187
    %p189 = scmp.ne.s32.totalorder %s178, %s179
    %p190 = scmp.eq.s32.totalorder %s18, 0
    %p191 = por %p189, %p190
    %p192 = scmp.ne.s32.totalorder %s178, %s179
    %p193 = scmp.eq.s32.totalorder %s19, 7
    %p194 = por %p192, %p193
    %p196 = scmp.ne.s32.totalorder %s179, %s195
    %p197 = scmp.eq.s32.totalorder %s19, 0
    %p198 = por %p196, %p197
    %p199 = scmp.le.s32.totalorder 1, %s13
    %p200 = scmp.lt.s32.totalorder %s13, 9
    %p201 = pnand %p199, %p200
    %p202 = pneg %p201
    // Predicated region
    $region9: #{window_msa_forward.1} parent=5 // pred_check
      _
    $region10: #{window_msa_forward.1} parent=5 // pred_check_branch
      %204 = sbr.rel (%p201) target = $region12
    $region11: #{window_msa_forward.1} parent=5 // pred_region
      %s205 = ssub.s32 %s13, 1
      // Predicated region
      $region13: #{window_msa_forward.1} parent=11 // pred_check
        %p206 = pneg %p60
      $region14: #{window_msa_forward.1} parent=11 // pred_check_branch
        %208 = sbr.rel (%p206) target = $region16
      $region15: #{window_msa_forward.1} parent=11 // pred_region
        _
      $region16: #{window_msa_forward.1} parent=11 // pred_fallthru
        _
      // Predicated region
      $region17: #{window_msa_forward.1} parent=11 // pred_check
        %p209 = pneg %p81
      $region18: #{window_msa_forward.1} parent=11 // pred_check_branch
        %211 = sbr.rel (%p209) target = $region20
      $region19: #{window_msa_forward.1} parent=11 // pred_region
        _
      $region20: #{window_msa_forward.1} parent=11 // pred_fallthru
        _
      // Predicated region
      $region21: #{window_msa_forward.1} parent=11 // pred_check
        %p212 = pneg %p102
      $region22: #{window_msa_forward.1} parent=11 // pred_check_branch
        %214 = sbr.rel (%p212) target = $region24
      $region23: #{window_msa_forward.1} parent=11 // pred_region
        _
      $region24: #{window_msa_forward.1} parent=11 // pred_fallthru
        _
      // Predicated region
      $region25: #{window_msa_forward.1} parent=11 // pred_check
        %p215 = pneg %p123
      $region26: #{window_msa_forward.1} parent=11 // pred_check_branch
        %217 = sbr.rel (%p215) target = $region28
      $region27: #{window_msa_forward.1} parent=11 // pred_region
        _
      $region28: #{window_msa_forward.1} parent=11 // pred_fallthru
        _
      // Predicated region
      $region29: #{window_msa_forward.1} parent=11 // pred_check
        %p218 = pneg %p144
      $region30: #{window_msa_forward.1} parent=11 // pred_check_branch
        %220 = sbr.rel (%p218) target = $region32
      $region31: #{window_msa_forward.1} parent=11 // pred_region
        _
      $region32: #{window_msa_forward.1} parent=11 // pred_fallthru
        _
      // Predicated region
      $region33: #{window_msa_forward.1} parent=11 // pred_check
        %p221 = pneg %p165
      $region34: #{window_msa_forward.1} parent=11 // pred_check_branch
        %223 = sbr.rel (%p221) target = $region36
      $region35: #{window_msa_forward.1} parent=11 // pred_region
        _
      $region36: #{window_msa_forward.1} parent=11 // pred_fallthru
        _
    $region12: #{window_msa_forward.1} parent=5 // pred_fallthru
      _
    %p224 = scmp.lt.s32.totalorder %s13, 8
    // Predicated region
    $region37: #{window_msa_forward.1} parent=5 // pred_check
      %p225 = pneg %p224
    $region38: #{window_msa_forward.1} parent=5 // pred_check_branch
      %227 = sbr.rel (%p225) target = $region40
    $region39: #{window_msa_forward.1} parent=5 // pred_region
      // Predicated region
      $region41: #{window_msa_forward.1} parent=39 // pred_check
        %p228 = pneg %p33
      $region42: #{window_msa_forward.1} parent=39 // pred_check_branch
        %230 = sbr.rel (%p228) target = $region44
      $region43: #{window_msa_forward.1} parent=39 // pred_region
        %s231 = smul.u32 16, %s13
        %p232 = scmp.lt.s32.totalorder %s231, 127
        %s233 = scalar_select %p232, %s231, 127
        %s234 = smul.addr %s233, 4
        %s235 = scalar_lea.vmem %s0, %s234
        %s236 = smul.u32 16, %s13
      $region44: #{window_msa_forward.1} parent=39 // pred_fallthru
        _
    $region40: #{window_msa_forward.1} parent=5 // pred_fallthru
      _
    %p237 = scmp.le.s32.totalorder 1, %s13
    %p238 = scmp.lt.s32.totalorder %s13, 9
    %p239 = pnand %p237, %p238
    %p240 = pneg %p239
    // Predicated region
    $region45: #{window_msa_forward.1} parent=5 // pred_check
      _
    $region46: #{window_msa_forward.1} parent=5 // pred_check_branch
      %242 = sbr.rel (%p239) target = $region48
    $region47: #{window_msa_forward.1} parent=5 // pred_region
      %s243 = ssub.s32 %s13, 1
      %s244 = smul.u32 16, %s18
      %p245 = scmp.lt.s32.totalorder %s244, 127
      %s246 = scalar_select %p245, %s244, 127
      %s247 = smul.addr %s246, 4
      %s248 = scalar_lea.vmem %s0, %s247
      %p249 = pneg %p39
      %p250 = pneg %p36
      %p251 = pneg %p60
      %p252 = pneg %p57
      %p253 = pneg %p81
      %p254 = pneg %p78
      %p255 = pneg %p102
      %p256 = pneg %p99
      %p257 = pneg %p123
      %p258 = pneg %p120
      %p259 = pneg %p144
      %p260 = pneg %p141
      %p261 = pneg %p165
      %p262 = pneg %p162
      %p263 = pneg %p191
      %p264 = pneg %p188
      %s265 = smul.u32 16, %s18
      %p266 = scmp.lt.s32.totalorder %s265, 127
      %s267 = scalar_select %p266, %s265, 127
      %s268 = smul.addr %s267, 8
      %s269 = scalar_lea.vmem %s7, %s268
      %s270 = smul.u32 16, %s18
      %p271 = scmp.lt.s32.totalorder %s270, 127
      %s272 = scalar_select %p271, %s270, 127
      %s273 = smul.addr %s272, 4
      %s274 = scalar_lea.vmem %s0, %s273
      %s275 = smul.u32 16, %s18
      %s276 = smul.u32 16, %s18
      %p277 = scmp.lt.s32.totalorder %s276, 127
      %s278 = scalar_select %p277, %s276, 127
      %s279 = smul.addr %s278, 8
      %s280 = scalar_lea.vmem %s7, %s279
      %s281 = smul.u32 16, %s18
      %v283 = vld [vmem:[%s274] sm:$0xf]
      %v284 = vld [vmem:[%s274 + $0x4] sm:$0xf]
      %v285 = vld [vmem:[%s274 + $0x8] sm:$0xf]
      %v286 = vld [vmem:[%s274 + $0xc] sm:$0xf]
      %v287 = vld [vmem:[%s274 + $0x10] sm:$0xf]
      %v288 = vld [vmem:[%s274 + $0x14] sm:$0xf]
      %v289 = vld [vmem:[%s274 + $0x18] sm:$0xf]
      %v290 = vld [vmem:[%s274 + $0x1c] sm:$0xf]
      %v291 = vld [vmem:[%s274 + $0x20] sm:$0xf]
      %v292 = vld [vmem:[%s274 + $0x24] sm:$0xf]
      %v293 = vld [vmem:[%s274 + $0x28] sm:$0xf]
      %v294 = vld [vmem:[%s274 + $0x2c] sm:$0xf]
      %v295 = vld [vmem:[%s274 + $0x30] sm:$0xf]
      %v296 = vld [vmem:[%s274 + $0x34] sm:$0xf]
      %v297 = vld [vmem:[%s274 + $0x38] sm:$0xf]
      %v298 = vld [vmem:[%s274 + $0x3c] sm:$0xf]
      %v299 = vld [vmem:[%s1] sm:$0xff]
      %v300 = vld [vmem:[%s2] sm:$0x3]
      %v302 = vlaneseq
      %v303 = vshrl.u32 %v302, 7
      %v304 = vsub.s32 0, %v303
      %v305 = vrot.slane %v300, %v304
      %v306 = vlaneseq
      %v307 = vshrl.u32 %v306, 7
      %v308 = vsub.s32 1, %v307
      %v309 = vrot.slane %v300, %v308
      %v328 = vunpack.c.l.b16 %v283
      %v329 = vunpack.c.l.b16 %v284
      %v330 = vunpack.c.l.b16 %v285
      %v331 = vunpack.c.l.b16 %v286
      %v332 = vunpack.c.l.b16 %v287
      %v333 = vunpack.c.l.b16 %v288
      %v334 = vunpack.c.l.b16 %v289
      %v335 = vunpack.c.l.b16 %v290
      %v336 = vunpack.c.l.b16 %v291
      %v337 = vunpack.c.l.b16 %v292
      %v338 = vunpack.c.l.b16 %v293
      %v339 = vunpack.c.l.b16 %v294
      %v340 = vunpack.c.l.b16 %v295
      %v341 = vunpack.c.l.b16 %v296
      %v342 = vunpack.c.l.b16 %v297
      %v343 = vunpack.c.l.b16 %v298
      %v344 = vpack.c.b16 %v329, %v328
      %v345 = vpack.c.b16 %v331, %v330
      %v346 = vpack.c.b16 %v333, %v332
      %v347 = vpack.c.b16 %v335, %v334
      %v348 = vpack.c.b16 %v337, %v336
      %v349 = vpack.c.b16 %v339, %v338
      %v350 = vpack.c.b16 %v341, %v340
      %v351 = vpack.c.b16 %v343, %v342
      %v353 = vunpack.c.l.b16 %v299
      %v354 = vunpack.c.h.b16 %v299
      %v355 = vpack.c.b16 %v353, %v353
      %v356 = vpack.c.b16 %v354, %v354
      %vm357 = vcmask 64512
      %v359 = vsel %vm357, %v344, 0
      %v362 = vsel %vm357, %v345, 0
      %v365 = vsel %vm357, %v346, 0
      %v368 = vsel %vm357, %v347, 0
      %v371 = vsel %vm357, %v348, 0
      %v374 = vsel %vm357, %v349, 0
      %v377 = vsel %vm357, %v350, 0
      %v380 = vsel %vm357, %v351, 0
      %vm382 = vcmask 1043456
      %v384 = vsel %vm382, %v355, 0
      %v387 = vsel %vm382, %v356, 0
      %389 = vmatprep.subr.bf16.mxu0 0
      %390 = vmatpush1.bf16.msra.mxu0 0
      %391 = vmatprep.subr.bf16.mxu0 0
      %392 = vmatpush1.bf16.msra.mxu0 0
      %393 = vmatprep.subr.bf16.mxu0 0
      %394 = vmatpush1.bf16.msra.mxu0 0
      %395 = vmatprep.subr.bf16.mxu0 0
      %396 = vmatpush1.bf16.msra.mxu0 0
      %397 = vmatprep.subr.bf16.mxu0 0
      %398 = vmatpush1.bf16.msra.mxu0 0
      %399 = vmatprep.subr.bf16.mxu0 0
      %400 = vmatpush1.bf16.msra.mxu0 0
      %401 = vmatprep.subr.bf16.mxu0 0
      %402 = vmatpush1.bf16.msra.mxu0 0
      %403 = vmatprep.subr.bf16.mxu0 %v387
      %404 = vmatpush1.bf16.msra.mxu0 %v384
      %405 = vmatprep.subr.bf16.mxu0 0
      %406 = vmatpush2.bf16.msra.mxu0 0
      %407 = vmatprep.subr.bf16.mxu0 0
      %408 = vmatpush2.bf16.msra.mxu0 0
      %409 = vmatprep.subr.bf16.mxu0 0
      %410 = vmatpush2.bf16.msra.mxu0 0
      %411 = vmatprep.subr.bf16.mxu0 0
      %412 = vmatpush2.bf16.msra.mxu0 0
      %413 = vmatprep.subr.bf16.mxu0 0
      %414 = vmatpush2.bf16.msra.mxu0 0
      %415 = vmatprep.subr.bf16.mxu0 0
      %416 = vmatpush2.bf16.msra.mxu0 0
      %417 = vmatprep.subr.bf16.mxu0 0
      %418 = vmatpush2.bf16.msra.mxu0 0
      %419 = vmatprep.subr.bf16.mxu0 0
      %420 = vmatpush2.bf16.msra.mxu0 0
      %421 = vmatprep.mubr.bf16.mxu0 0
      %422 = vmatmul.mubr.bf16.gmra.mxu0 %v359
      %v423 = vpop.f32.mrf.mxu0
      %v424 = vadd.f32 %v305, %v423
      %v425 = vpop.f32.mrf.mxu0
      %v426 = vadd.f32 %v309, %v425
      %v427 = vpop.f32.mrf.mxu0
      %v428 = vadd.f32 %v305, %v427
      %v429 = vpop.f32.mrf.mxu0
      %v430 = vadd.f32 %v309, %v429
      %431 = vmatprep.mubr.bf16.mxu0 0
      %432 = vmatmul.mubr.bf16.gmra.mxu0 %v362
      %v433 = vpop.f32.mrf.mxu0
      %v434 = vadd.f32 %v305, %v433
      %v435 = vpop.f32.mrf.mxu0
      %v436 = vadd.f32 %v309, %v435
      %v437 = vpop.f32.mrf.mxu0
      %v438 = vadd.f32 %v305, %v437
      %v439 = vpop.f32.mrf.mxu0
      %v440 = vadd.f32 %v309, %v439
      %441 = vmatprep.mubr.bf16.mxu0 0
      %442 = vmatmul.mubr.bf16.gmra.mxu0 %v365
      %v443 = vpop.f32.mrf.mxu0
      %v444 = vadd.f32 %v305, %v443
      %v445 = vpop.f32.mrf.mxu0
      %v446 = vadd.f32 %v309, %v445
      %v447 = vpop.f32.mrf.mxu0
      %v448 = vadd.f32 %v305, %v447
      %v449 = vpop.f32.mrf.mxu0
      %v450 = vadd.f32 %v309, %v449
      %451 = vmatprep.mubr.bf16.mxu0 0
      %452 = vmatmul.mubr.bf16.gmra.mxu0 %v368
      %v453 = vpop.f32.mrf.mxu0
      %v454 = vadd.f32 %v305, %v453
      %v455 = vpop.f32.mrf.mxu0
      %v456 = vadd.f32 %v309, %v455
      %v457 = vpop.f32.mrf.mxu0
      %v458 = vadd.f32 %v305, %v457
      %v459 = vpop.f32.mrf.mxu0
      %v460 = vadd.f32 %v309, %v459
      %461 = vmatprep.mubr.bf16.mxu0 0
      %462 = vmatmul.mubr.bf16.gmra.mxu0 %v371
      %v463 = vpop.f32.mrf.mxu0
      %v464 = vadd.f32 %v305, %v463
      %v465 = vpop.f32.mrf.mxu0
      %v466 = vadd.f32 %v309, %v465
      %v467 = vpop.f32.mrf.mxu0
      %v468 = vadd.f32 %v305, %v467
      %v469 = vpop.f32.mrf.mxu0
      %v470 = vadd.f32 %v309, %v469
      %471 = vmatprep.mubr.bf16.mxu0 0
      %472 = vmatmul.mubr.bf16.gmra.mxu0 %v374
      %v473 = vpop.f32.mrf.mxu0
      %v474 = vadd.f32 %v305, %v473
      %v475 = vpop.f32.mrf.mxu0
      %v476 = vadd.f32 %v309, %v475
      %v477 = vpop.f32.mrf.mxu0
      %v478 = vadd.f32 %v305, %v477
      %v479 = vpop.f32.mrf.mxu0
      %v480 = vadd.f32 %v309, %v479
      %481 = vmatprep.mubr.bf16.mxu0 0
      %482 = vmatmul.mubr.bf16.gmra.mxu0 %v377
      %v483 = vpop.f32.mrf.mxu0
      %v484 = vadd.f32 %v305, %v483
      %v485 = vpop.f32.mrf.mxu0
      %v486 = vadd.f32 %v309, %v485
      %v487 = vpop.f32.mrf.mxu0
      %v488 = vadd.f32 %v305, %v487
      %v489 = vpop.f32.mrf.mxu0
      %v490 = vadd.f32 %v309, %v489
      %491 = vmatprep.mubr.bf16.mxu0 0
      %492 = vmatmul.mubr.bf16.gmra.mxu0 %v380
      %v493 = vpop.f32.mrf.mxu0
      %v494 = vadd.f32 %v305, %v493
      %v495 = vpop.f32.mrf.mxu0
      %v496 = vadd.f32 %v309, %v495
      %v497 = vpop.f32.mrf.mxu0
      %v498 = vadd.f32 %v305, %v497
      %v499 = vpop.f32.mrf.mxu0
      %v500 = vadd.f32 %v309, %v499
      %501 = vdwg.mxu0
      %v502 = vmul.f32 %v424, %v424
      %v503 = vmul.f32 %v428, %v428
      %v504 = vmul.f32 %v434, %v434
      %v505 = vmul.f32 %v438, %v438
      %v506 = vmul.f32 %v444, %v444
      %v507 = vmul.f32 %v448, %v448
      %v508 = vmul.f32 %v454, %v454
      %v509 = vmul.f32 %v458, %v458
      %v510 = vmul.f32 %v464, %v464
      %v511 = vmul.f32 %v468, %v468
      %v512 = vmul.f32 %v474, %v474
      %v513 = vmul.f32 %v478, %v478
      %v514 = vmul.f32 %v484, %v484
      %v515 = vmul.f32 %v488, %v488
      %v516 = vmul.f32 %v494, %v494
      %v517 = vmul.f32 %v498, %v498
      %vm518 = vcmask 195584
      %v519 = vsel %vm518, %v502, 0.0
      %520 = vadd.xlane.f32.xlu0 %v519
      %v521 = vpop.xlane.xlu0 %520
      %v522 = vsel %vm518, %v503, 0.0
      %523 = vadd.xlane.f32.xlu0 %v522
      %v524 = vpop.xlane.xlu0 %523
      %v525 = vsel %vm518, %v504, 0.0
      %526 = vadd.xlane.f32.xlu0 %v525
      %v527 = vpop.xlane.xlu0 %526
      %v528 = vsel %vm518, %v505, 0.0
      %529 = vadd.xlane.f32.xlu0 %v528
      %v530 = vpop.xlane.xlu0 %529
      %v531 = vsel %vm518, %v506, 0.0
      %532 = vadd.xlane.f32.xlu0 %v531
      %v533 = vpop.xlane.xlu0 %532
      %v534 = vsel %vm518, %v507, 0.0
      %535 = vadd.xlane.f32.xlu0 %v534
      %v536 = vpop.xlane.xlu0 %535
      %v537 = vsel %vm518, %v508, 0.0
      %538 = vadd.xlane.f32.xlu0 %v537
      %v539 = vpop.xlane.xlu0 %538
      %v540 = vsel %vm518, %v509, 0.0
      %541 = vadd.xlane.f32.xlu0 %v540
      %v542 = vpop.xlane.xlu0 %541
      %v543 = vsel %vm518, %v510, 0.0
      %544 = vadd.xlane.f32.xlu0 %v543
      %v545 = vpop.xlane.xlu0 %544
      %v546 = vsel %vm518, %v511, 0.0
      %547 = vadd.xlane.f32.xlu0 %v546
      %v548 = vpop.xlane.xlu0 %547
      %v549 = vsel %vm518, %v512, 0.0
      %550 = vadd.xlane.f32.xlu0 %v549
      %v551 = vpop.xlane.xlu0 %550
      %v552 = vsel %vm518, %v513, 0.0
      %553 = vadd.xlane.f32.xlu0 %v552
      %v554 = vpop.xlane.xlu0 %553
      %v555 = vsel %vm518, %v514, 0.0
      %556 = vadd.xlane.f32.xlu0 %v555
      %v557 = vpop.xlane.xlu0 %556
      %v558 = vsel %vm518, %v515, 0.0
      %559 = vadd.xlane.f32.xlu0 %v558
      %v560 = vpop.xlane.xlu0 %559
      %v561 = vsel %vm518, %v516, 0.0
      %562 = vadd.xlane.f32.xlu0 %v561
      %v563 = vpop.xlane.xlu0 %562
      %v564 = vsel %vm518, %v517, 0.0
      %565 = vadd.xlane.f32.xlu0 %v564
      %v566 = vpop.xlane.xlu0 %565
      %v567 = vmax.f32 %v521, 1e-24
      %v568 = vmax.f32 %v524, 1e-24
      %v569 = vmax.f32 %v527, 1e-24
      %v570 = vmax.f32 %v530, 1e-24
      %v571 = vmax.f32 %v533, 1e-24
      %v572 = vmax.f32 %v536, 1e-24
      %v573 = vmax.f32 %v539, 1e-24
      %v574 = vmax.f32 %v542, 1e-24
      %v575 = vmax.f32 %v545, 1e-24
      %v576 = vmax.f32 %v548, 1e-24
      %v577 = vmax.f32 %v551, 1e-24
      %v578 = vmax.f32 %v554, 1e-24
      %v579 = vmax.f32 %v557, 1e-24
      %v580 = vmax.f32 %v560, 1e-24
      %v581 = vmax.f32 %v563, 1e-24
      %v582 = vmax.f32 %v566, 1e-24
      %v583 = vrsqrt.pop %v567
      %v584 = vrsqrt.pop %v568
      %v585 = vrsqrt.pop %v569
      %v586 = vrsqrt.pop %v570
      %v587 = vrsqrt.pop %v571
      %v588 = vrsqrt.pop %v572
      %v589 = vrsqrt.pop %v573
      %v590 = vrsqrt.pop %v574
      %v591 = vrsqrt.pop %v575
      %v592 = vrsqrt.pop %v576
      %v593 = vrsqrt.pop %v577
      %v594 = vrsqrt.pop %v578
      %v595 = vrsqrt.pop %v579
      %v596 = vrsqrt.pop %v580
      %v597 = vrsqrt.pop %v581
      %v598 = vrsqrt.pop %v582
      %v599 = vmul.f32 %v424, %v583
      %v600 = vmul.f32 %v428, %v584
      %v601 = vmul.f32 %v434, %v585
      %v602 = vmul.f32 %v438, %v586
      %v603 = vmul.f32 %v444, %v587
      %v604 = vmul.f32 %v448, %v588
      %v605 = vmul.f32 %v454, %v589
      %v606 = vmul.f32 %v458, %v590
      %v607 = vmul.f32 %v464, %v591
      %v608 = vmul.f32 %v468, %v592
      %v609 = vmul.f32 %v474, %v593
      %v610 = vmul.f32 %v478, %v594
      %v611 = vmul.f32 %v484, %v595
      %v612 = vmul.f32 %v488, %v596
      %v613 = vmul.f32 %v494, %v597
      %v614 = vmul.f32 %v498, %v598
      %631 = vrot.lane.b32.xlu0 %v502, 80
      %v632 = vpop.permute.xlu0 %631
      %633 = vrot.lane.b32.xlu0 %v503, 80
      %v634 = vpop.permute.xlu0 %633
      %635 = vrot.lane.b32.xlu0 %v504, 80
      %v636 = vpop.permute.xlu0 %635
      %637 = vrot.lane.b32.xlu0 %v505, 80
      %v638 = vpop.permute.xlu0 %637
      %639 = vrot.lane.b32.xlu0 %v506, 80
      %v640 = vpop.permute.xlu0 %639
      %641 = vrot.lane.b32.xlu0 %v507, 80
      %v642 = vpop.permute.xlu0 %641
      %643 = vrot.lane.b32.xlu0 %v508, 80
      %v644 = vpop.permute.xlu0 %643
      %645 = vrot.lane.b32.xlu0 %v509, 80
      %v646 = vpop.permute.xlu0 %645
      %647 = vrot.lane.b32.xlu0 %v510, 80
      %v648 = vpop.permute.xlu0 %647
      %649 = vrot.lane.b32.xlu0 %v511, 80
      %v650 = vpop.permute.xlu0 %649
      %651 = vrot.lane.b32.xlu0 %v512, 80
      %v652 = vpop.permute.xlu0 %651
      %653 = vrot.lane.b32.xlu0 %v513, 80
      %v654 = vpop.permute.xlu0 %653
      %655 = vrot.lane.b32.xlu0 %v514, 80
      %v656 = vpop.permute.xlu0 %655
      %657 = vrot.lane.b32.xlu0 %v515, 80
      %v658 = vpop.permute.xlu0 %657
      %659 = vrot.lane.b32.xlu0 %v516, 80
      %v660 = vpop.permute.xlu0 %659
      %661 = vrot.lane.b32.xlu0 %v517, 80
      %v662 = vpop.permute.xlu0 %661
      %v679 = vsel %vm518, %v632, 0.0
      %680 = vadd.xlane.f32.xlu0 %v679
      %v681 = vpop.xlane.xlu0 %680
      %v682 = vsel %vm518, %v634, 0.0
      %683 = vadd.xlane.f32.xlu0 %v682
      %v684 = vpop.xlane.xlu0 %683
      %v685 = vsel %vm518, %v636, 0.0
      %686 = vadd.xlane.f32.xlu0 %v685
      %v687 = vpop.xlane.xlu0 %686
      %v688 = vsel %vm518, %v638, 0.0
      %689 = vadd.xlane.f32.xlu0 %v688
      %v690 = vpop.xlane.xlu0 %689
      %v691 = vsel %vm518, %v640, 0.0
      %692 = vadd.xlane.f32.xlu0 %v691
      %v693 = vpop.xlane.xlu0 %692
      %v694 = vsel %vm518, %v642, 0.0
      %695 = vadd.xlane.f32.xlu0 %v694
      %v696 = vpop.xlane.xlu0 %695
      %v697 = vsel %vm518, %v644, 0.0
      %698 = vadd.xlane.f32.xlu0 %v697
      %v699 = vpop.xlane.xlu0 %698
      %v700 = vsel %vm518, %v646, 0.0
      %701 = vadd.xlane.f32.xlu0 %v700
      %v702 = vpop.xlane.xlu0 %701
      %v703 = vsel %vm518, %v648, 0.0
      %704 = vadd.xlane.f32.xlu0 %v703
      %v705 = vpop.xlane.xlu0 %704
      %v706 = vsel %vm518, %v650, 0.0
      %707 = vadd.xlane.f32.xlu0 %v706
      %v708 = vpop.xlane.xlu0 %707
      %v709 = vsel %vm518, %v652, 0.0
      %710 = vadd.xlane.f32.xlu0 %v709
      %v711 = vpop.xlane.xlu0 %710
      %v712 = vsel %vm518, %v654, 0.0
      %713 = vadd.xlane.f32.xlu0 %v712
      %v714 = vpop.xlane.xlu0 %713
      %v715 = vsel %vm518, %v656, 0.0
      %716 = vadd.xlane.f32.xlu0 %v715
      %v717 = vpop.xlane.xlu0 %716
      %v718 = vsel %vm518, %v658, 0.0
      %719 = vadd.xlane.f32.xlu0 %v718
      %v720 = vpop.xlane.xlu0 %719
      %v721 = vsel %vm518, %v660, 0.0
      %722 = vadd.xlane.f32.xlu0 %v721
      %v723 = vpop.xlane.xlu0 %722
      %v724 = vsel %vm518, %v662, 0.0
      %725 = vadd.xlane.f32.xlu0 %v724
      %v726 = vpop.xlane.xlu0 %725
      %v727 = vmax.f32 %v681, 1e-24
      %v728 = vmax.f32 %v684, 1e-24
      %v729 = vmax.f32 %v687, 1e-24
      %v730 = vmax.f32 %v690, 1e-24
      %v731 = vmax.f32 %v693, 1e-24
      %v732 = vmax.f32 %v696, 1e-24
      %v733 = vmax.f32 %v699, 1e-24
      %v734 = vmax.f32 %v702, 1e-24
      %v735 = vmax.f32 %v705, 1e-24
      %v736 = vmax.f32 %v708, 1e-24
      %v737 = vmax.f32 %v711, 1e-24
      %v738 = vmax.f32 %v714, 1e-24
      %v739 = vmax.f32 %v717, 1e-24
      %v740 = vmax.f32 %v720, 1e-24
      %v741 = vmax.f32 %v723, 1e-24
      %v742 = vmax.f32 %v726, 1e-24
      %v743 = vrsqrt.pop %v727
      %v744 = vrsqrt.pop %v728
      %v745 = vrsqrt.pop %v729
      %v746 = vrsqrt.pop %v730
      %v747 = vrsqrt.pop %v731
      %v748 = vrsqrt.pop %v732
      %v749 = vrsqrt.pop %v733
      %v750 = vrsqrt.pop %v734
      %v751 = vrsqrt.pop %v735
      %v752 = vrsqrt.pop %v736
      %v753 = vrsqrt.pop %v737
      %v754 = vrsqrt.pop %v738
      %v755 = vrsqrt.pop %v739
      %v756 = vrsqrt.pop %v740
      %v757 = vrsqrt.pop %v741
      %v758 = vrsqrt.pop %v742
      %v759 = vmul.f32 %v424, %v743
      %v760 = vmul.f32 %v428, %v744
      %v761 = vmul.f32 %v434, %v745
      %v762 = vmul.f32 %v438, %v746
      %v763 = vmul.f32 %v444, %v747
      %v764 = vmul.f32 %v448, %v748
      %v765 = vmul.f32 %v454, %v749
      %v766 = vmul.f32 %v458, %v750
      %v767 = vmul.f32 %v464, %v751
      %v768 = vmul.f32 %v468, %v752
      %v769 = vmul.f32 %v474, %v753
      %v770 = vmul.f32 %v478, %v754
      %v771 = vmul.f32 %v484, %v755
      %v772 = vmul.f32 %v488, %v756
      %v773 = vmul.f32 %v494, %v757
      %v774 = vmul.f32 %v498, %v758
      %v775 = vpack.c.bf16 %v600, %v599
      %v776 = vpack.c.bf16 %v602, %v601
      %v777 = vpack.c.bf16 %v604, %v603
      %v778 = vpack.c.bf16 %v606, %v605
      %v779 = vpack.c.bf16 %v608, %v607
      %v780 = vpack.c.bf16 %v610, %v609
      %v781 = vpack.c.bf16 %v612, %v611
      %v782 = vpack.c.bf16 %v614, %v613
      %v783 = vpack.c.bf16 %v760, %v759
      %v784 = vpack.c.bf16 %v762, %v761
      %v785 = vpack.c.bf16 %v764, %v763
      %v786 = vpack.c.bf16 %v766, %v765
      %v787 = vpack.c.bf16 %v768, %v767
      %v788 = vpack.c.bf16 %v770, %v769
      %v789 = vpack.c.bf16 %v772, %v771
      %v790 = vpack.c.bf16 %v774, %v773
      %799 = vrot.lane.b32.xlu0 %v783, 80
      %v800 = vpop.permute.xlu0 %799
      %801 = vrot.lane.b32.xlu0 %v784, 80
      %v802 = vpop.permute.xlu0 %801
      %803 = vrot.lane.b32.xlu0 %v785, 80
      %v804 = vpop.permute.xlu0 %803
      %805 = vrot.lane.b32.xlu0 %v786, 80
      %v806 = vpop.permute.xlu0 %805
      %807 = vrot.lane.b32.xlu0 %v787, 80
      %v808 = vpop.permute.xlu0 %807
      %809 = vrot.lane.b32.xlu0 %v788, 80
      %v810 = vpop.permute.xlu0 %809
      %811 = vrot.lane.b32.xlu0 %v789, 80
      %v812 = vpop.permute.xlu0 %811
      %813 = vrot.lane.b32.xlu0 %v790, 80
      %v814 = vpop.permute.xlu0 %813
      %v816 = vsel %vm518, %v775, 0
      %v819 = vsel %vm518, %v776, 0
      %v822 = vsel %vm518, %v777, 0
      %v825 = vsel %vm518, %v778, 0
      %v828 = vsel %vm518, %v779, 0
      %v831 = vsel %vm518, %v780, 0
      %v834 = vsel %vm518, %v781, 0
      %v837 = vsel %vm518, %v782, 0
      %v840 = vsel %vm518, %v800, 0
      %v843 = vsel %vm518, %v802, 0
      %v846 = vsel %vm518, %v804, 0
      %v849 = vsel %vm518, %v806, 0
      %v852 = vsel %vm518, %v808, 0
      %v855 = vsel %vm518, %v810, 0
      %v858 = vsel %vm518, %v812, 0
      %v861 = vsel %vm518, %v814, 0
      %863 = vmatprep.subr.bf16.mxu0 0
      %864 = vmatpush1.bf16.xpose.msra.mxu0 %v861
      %865 = vmatprep.subr.bf16.mxu0 0
      %866 = vmatpush1.bf16.xpose.msra.mxu0 %v858
      %867 = vmatprep.subr.bf16.mxu0 0
      %868 = vmatpush1.bf16.xpose.msra.mxu0 %v855
      %869 = vmatprep.subr.bf16.mxu0 0
      %870 = vmatpush1.bf16.xpose.msra.mxu0 %v852
      %871 = vmatprep.subr.bf16.mxu0 0
      %872 = vmatpush1.bf16.xpose.msra.mxu0 %v849
      %873 = vmatprep.subr.bf16.mxu0 0
      %874 = vmatpush1.bf16.xpose.msra.mxu0 %v846
      %875 = vmatprep.subr.bf16.mxu0 0
      %876 = vmatpush1.bf16.xpose.msra.mxu0 %v843
      %877 = vmatprep.subr.bf16.mxu0 0
      %878 = vmatpush1.bf16.xpose.msra.mxu0 %v840
      %879 = vmatprep.subr.bf16.mxu0 0
      %880 = vmatpush2.bf16.xpose.msra.mxu0 0
      %881 = vmatprep.subr.bf16.mxu0 0
      %882 = vmatpush2.bf16.xpose.msra.mxu0 0
      %883 = vmatprep.subr.bf16.mxu0 0
      %884 = vmatpush2.bf16.xpose.msra.mxu0 0
      %885 = vmatprep.subr.bf16.mxu0 0
      %886 = vmatpush2.bf16.xpose.msra.mxu0 0
      %887 = vmatprep.subr.bf16.mxu0 0
      %888 = vmatpush2.bf16.xpose.msra.mxu0 0
      %889 = vmatprep.subr.bf16.mxu0 0
      %890 = vmatpush2.bf16.xpose.msra.mxu0 0
      %891 = vmatprep.subr.bf16.mxu0 0
      %892 = vmatpush2.bf16.xpose.msra.mxu0 0
      %893 = vmatprep.subr.bf16.mxu0 0
      %894 = vmatpush2.bf16.xpose.msra.mxu0 0
      %895 = vmatprep.mubr.bf16.mxu0 0
      %896 = vmatmul.mubr.bf16.gmra.mxu0 %v816
      %v897 = vpop.f32.mrf.mxu0
      %v898 = vadd.f32 0.0, %v897
      %v899 = vpop.f32.mrf.mxu0
      %v900 = vpop.f32.mrf.mxu0
      %v901 = vadd.f32 0.0, %v900
      %v902 = vpop.f32.mrf.mxu0
      %903 = vmatprep.mubr.bf16.mxu0 0
      %904 = vmatmul.mubr.bf16.gmra.mxu0 %v819
      %v905 = vpop.f32.mrf.mxu0
      %v906 = vadd.f32 0.0, %v905
      %v907 = vpop.f32.mrf.mxu0
      %v908 = vpop.f32.mrf.mxu0
      %v909 = vadd.f32 0.0, %v908
      %v910 = vpop.f32.mrf.mxu0
      %911 = vmatprep.mubr.bf16.mxu0 0
      %912 = vmatmul.mubr.bf16.gmra.mxu0 %v822
      %v913 = vpop.f32.mrf.mxu0
      %v914 = vadd.f32 0.0, %v913
      %v915 = vpop.f32.mrf.mxu0
      %v916 = vpop.f32.mrf.mxu0
      %v917 = vadd.f32 0.0, %v916
      %v918 = vpop.f32.mrf.mxu0
      %919 = vmatprep.mubr.bf16.mxu0 0
      %920 = vmatmul.mubr.bf16.gmra.mxu0 %v825
      %v921 = vpop.f32.mrf.mxu0
      %v922 = vadd.f32 0.0, %v921
      %v923 = vpop.f32.mrf.mxu0
      %v924 = vpop.f32.mrf.mxu0
      %v925 = vadd.f32 0.0, %v924
      %v926 = vpop.f32.mrf.mxu0
      %927 = vmatprep.mubr.bf16.mxu0 0
      %928 = vmatmul.mubr.bf16.gmra.mxu0 %v828
      %v929 = vpop.f32.mrf.mxu0
      %v930 = vadd.f32 0.0, %v929
      %v931 = vpop.f32.mrf.mxu0
      %v932 = vpop.f32.mrf.mxu0
      %v933 = vadd.f32 0.0, %v932
      %v934 = vpop.f32.mrf.mxu0
      %935 = vmatprep.mubr.bf16.mxu0 0
      %936 = vmatmul.mubr.bf16.gmra.mxu0 %v831
      %v937 = vpop.f32.mrf.mxu0
      %v938 = vadd.f32 0.0, %v937
      %v939 = vpop.f32.mrf.mxu0
      %v940 = vpop.f32.mrf.mxu0
      %v941 = vadd.f32 0.0, %v940
      %v942 = vpop.f32.mrf.mxu0
      %943 = vmatprep.mubr.bf16.mxu0 0
      %944 = vmatmul.mubr.bf16.gmra.mxu0 %v834
      %v945 = vpop.f32.mrf.mxu0
      %v946 = vadd.f32 0.0, %v945
      %v947 = vpop.f32.mrf.mxu0
      %v948 = vpop.f32.mrf.mxu0
      %v949 = vadd.f32 0.0, %v948
      %v950 = vpop.f32.mrf.mxu0
      %951 = vmatprep.mubr.bf16.mxu0 0
      %952 = vmatmul.mubr.bf16.gmra.mxu0 %v837
      %v953 = vpop.f32.mrf.mxu0
      %v954 = vadd.f32 0.0, %v953
      %v955 = vpop.f32.mrf.mxu0
      %v956 = vpop.f32.mrf.mxu0
      %v957 = vadd.f32 0.0, %v956
      %v958 = vpop.f32.mrf.mxu0
      %959 = vdwg.mxu0
      %v960 = vld [vmem:[%s5] sm:$0xff]
      %v961 = vld [vmem:[%s5 + $0x8] sm:$0xff]
      %v962 = vld [vmem:[%s5 + $0x10] sm:$0xff]
      %v963 = vld [vmem:[%s5 + $0x18] sm:$0xff]
      %v964 = vld [vmem:[%s5 + $0x20] sm:$0xff]
      %v965 = vld [vmem:[%s5 + $0x28] sm:$0xff]
      %v966 = vld [vmem:[%s5 + $0x30] sm:$0xff]
      %v967 = vld [vmem:[%s5 + $0x38] sm:$0xff]
      %v968 = vld [vmem:[%s5 + $0x40] sm:$0xff]
      %v969 = vld [vmem:[%s5 + $0x48] sm:$0xff]
      %v970 = vld [vmem:[%s5 + $0x50] sm:$0xff]
      %v971 = vld [vmem:[%s5 + $0x58] sm:$0xff]
      %v972 = vld [vmem:[%s5 + $0x60] sm:$0xff]
      %v973 = vld [vmem:[%s5 + $0x68] sm:$0xff]
      %v974 = vld [vmem:[%s5 + $0x70] sm:$0xff]
      %v975 = vld [vmem:[%s5 + $0x78] sm:$0xff]
      %v976 = vmul.f32 %v898, %v960
      %v977 = vmul.f32 %v901, %v961
      %v978 = vmul.f32 %v906, %v962
      %v979 = vmul.f32 %v909, %v963
      %v980 = vmul.f32 %v914, %v964
      %v981 = vmul.f32 %v917, %v965
      %v982 = vmul.f32 %v922, %v966
      %v983 = vmul.f32 %v925, %v967
      %v984 = vmul.f32 %v930, %v968
      %v985 = vmul.f32 %v933, %v969
      %v986 = vmul.f32 %v938, %v970
      %v987 = vmul.f32 %v941, %v971
      %v988 = vmul.f32 %v946, %v972
      %v989 = vmul.f32 %v949, %v973
      %v990 = vmul.f32 %v954, %v974
      %v991 = vmul.f32 %v957, %v975
      %v992 = vld [vmem:[%s6] sm:$0xff]
      %v993 = vld [vmem:[%s6 + $0x8] sm:$0xff]
      %v994 = vld [vmem:[%s6 + $0x10] sm:$0xff]
      %v995 = vld [vmem:[%s6 + $0x18] sm:$0xff]
      %v996 = vld [vmem:[%s6 + $0x20] sm:$0xff]
      %v997 = vld [vmem:[%s6 + $0x28] sm:$0xff]
      %v998 = vld [vmem:[%s6 + $0x30] sm:$0xff]
      %v999 = vld [vmem:[%s6 + $0x38] sm:$0xff]
      %v1000 = vld [vmem:[%s6 + $0x40] sm:$0xff]
      %v1001 = vld [vmem:[%s6 + $0x48] sm:$0xff]
      %v1002 = vld [vmem:[%s6 + $0x50] sm:$0xff]
      %v1003 = vld [vmem:[%s6 + $0x58] sm:$0xff]
      %v1004 = vld [vmem:[%s6 + $0x60] sm:$0xff]
      %v1005 = vld [vmem:[%s6 + $0x68] sm:$0xff]
      %v1006 = vld [vmem:[%s6 + $0x70] sm:$0xff]
      %v1007 = vld [vmem:[%s6 + $0x78] sm:$0xff]
      %v1008 = vadd.f32 %v976, %v992
      %v1009 = vadd.f32 %v977, %v993
      %v1010 = vadd.f32 %v978, %v994
      %v1011 = vadd.f32 %v979, %v995
      %v1012 = vadd.f32 %v980, %v996
      %v1013 = vadd.f32 %v981, %v997
      %v1014 = vadd.f32 %v982, %v998
      %v1015 = vadd.f32 %v983, %v999
      %v1016 = vadd.f32 %v984, %v1000
      %v1017 = vadd.f32 %v985, %v1001
      %v1018 = vadd.f32 %v986, %v1002
      %v1019 = vadd.f32 %v987, %v1003
      %v1020 = vadd.f32 %v988, %v1004
      %v1021 = vadd.f32 %v989, %v1005
      %v1022 = vadd.f32 %v990, %v1006
      %v1023 = vadd.f32 %v991, %v1007
      %v1024 = vpack.c.bf16 %v1009, %v1008
      %v1025 = vpack.c.bf16 %v1011, %v1010
      %v1026 = vpack.c.bf16 %v1013, %v1012
      %v1027 = vpack.c.bf16 %v1015, %v1014
      %v1028 = vpack.c.bf16 %v1017, %v1016
      %v1029 = vpack.c.bf16 %v1019, %v1018
      %v1030 = vpack.c.bf16 %v1021, %v1020
      %v1031 = vpack.c.bf16 %v1023, %v1022
      %v1032 = vpack.c.bf16 %v428, %v424
      %v1033 = vpack.c.bf16 %v438, %v434
      %v1034 = vpack.c.bf16 %v448, %v444
      %v1035 = vpack.c.bf16 %v458, %v454
      %v1036 = vpack.c.bf16 %v468, %v464
      %v1037 = vpack.c.bf16 %v478, %v474
      %v1038 = vpack.c.bf16 %v488, %v484
      %v1039 = vpack.c.bf16 %v498, %v494
      %1048 = vrot.lane.b32.xlu0 %v1032, 32
      %v1049 = vpop.permute.xlu0 %1048
      %1050 = vrot.lane.b32.xlu0 %v1033, 32
      %v1051 = vpop.permute.xlu0 %1050
      %1052 = vrot.lane.b32.xlu0 %v1034, 32
      %v1053 = vpop.permute.xlu0 %1052
      %1054 = vrot.lane.b32.xlu0 %v1035, 32
      %v1055 = vpop.permute.xlu0 %1054
      %1056 = vrot.lane.b32.xlu0 %v1036, 32
      %v1057 = vpop.permute.xlu0 %1056
      %1058 = vrot.lane.b32.xlu0 %v1037, 32
      %v1059 = vpop.permute.xlu0 %1058
      %1060 = vrot.lane.b32.xlu0 %v1038, 32
      %v1061 = vpop.permute.xlu0 %1060
      %1062 = vrot.lane.b32.xlu0 %v1039, 32
      %v1063 = vpop.permute.xlu0 %1062
      %1072 = vmatprep.subr.bf16.mxu0 0
      %1073 = vmatpush1.bf16.msra.mxu0 %v1063
      %1074 = vmatprep.subr.bf16.mxu0 0
      %1075 = vmatpush1.bf16.msra.mxu0 %v1061
      %1076 = vmatprep.subr.bf16.mxu0 0
      %1077 = vmatpush1.bf16.msra.mxu0 %v1059
      %1078 = vmatprep.subr.bf16.mxu0 0
      %1079 = vmatpush1.bf16.msra.mxu0 %v1057
      %1080 = vmatprep.subr.bf16.mxu0 0
      %1081 = vmatpush1.bf16.msra.mxu0 %v1055
      %1082 = vmatprep.subr.bf16.mxu0 0
      %1083 = vmatpush1.bf16.msra.mxu0 %v1053
      %1084 = vmatprep.subr.bf16.mxu0 0
      %1085 = vmatpush1.bf16.msra.mxu0 %v1051
      %1086 = vmatprep.subr.bf16.mxu0 0
      %1087 = vmatpush1.bf16.msra.mxu0 %v1049
      %1088 = vmatprep.subr.bf16.mxu0 0
      %1089 = vmatpush2.bf16.msra.mxu0 0
      %1090 = vmatprep.subr.bf16.mxu0 0
      %1091 = vmatpush2.bf16.msra.mxu0 0
      %1092 = vmatprep.subr.bf16.mxu0 0
      %1093 = vmatpush2.bf16.msra.mxu0 0
      %1094 = vmatprep.subr.bf16.mxu0 0
      %1095 = vmatpush2.bf16.msra.mxu0 0
      %1096 = vmatprep.subr.bf16.mxu0 0
      %1097 = vmatpush2.bf16.msra.mxu0 0
      %1098 = vmatprep.subr.bf16.mxu0 0
      %1099 = vmatpush2.bf16.msra.mxu0 0
      %1100 = vmatprep.subr.bf16.mxu0 0
      %1101 = vmatpush2.bf16.msra.mxu0 0
      %1102 = vmatprep.subr.bf16.mxu0 0
      %1103 = vmatpush2.bf16.msra.mxu0 0
      %1104 = vmatprep.mubr.bf16.mxu0 0
      %1105 = vmatmul.mubr.bf16.gmra.mxu0 %v1024
      %v1106 = vpop.f32.mrf.mxu0
      %v1107 = vadd.f32 0.0, %v1106
      %v1108 = vpop.f32.mrf.mxu0
      %v1109 = vpop.f32.mrf.mxu0
      %v1110 = vadd.f32 0.0, %v1109
      %v1111 = vpop.f32.mrf.mxu0
      %1112 = vmatprep.mubr.bf16.mxu0 0
      %1113 = vmatmul.mubr.bf16.gmra.mxu0 %v1025
      %v1114 = vpop.f32.mrf.mxu0
      %v1115 = vadd.f32 0.0, %v1114
      %v1116 = vpop.f32.mrf.mxu0
      %v1117 = vpop.f32.mrf.mxu0
      %v1118 = vadd.f32 0.0, %v1117
      %v1119 = vpop.f32.mrf.mxu0
      %1120 = vmatprep.mubr.bf16.mxu0 0
      %1121 = vmatmul.mubr.bf16.gmra.mxu0 %v1026
      %v1122 = vpop.f32.mrf.mxu0
      %v1123 = vadd.f32 0.0, %v1122
      %v1124 = vpop.f32.mrf.mxu0
      %v1125 = vpop.f32.mrf.mxu0
      %v1126 = vadd.f32 0.0, %v1125
      %v1127 = vpop.f32.mrf.mxu0
      %1128 = vmatprep.mubr.bf16.mxu0 0
      %1129 = vmatmul.mubr.bf16.gmra.mxu0 %v1027
      %v1130 = vpop.f32.mrf.mxu0
      %v1131 = vadd.f32 0.0, %v1130
      %v1132 = vpop.f32.mrf.mxu0
      %v1133 = vpop.f32.mrf.mxu0
      %v1134 = vadd.f32 0.0, %v1133
      %v1135 = vpop.f32.mrf.mxu0
      %1136 = vmatprep.mubr.bf16.mxu0 0
      %1137 = vmatmul.mubr.bf16.gmra.mxu0 %v1028
      %v1138 = vpop.f32.mrf.mxu0
      %v1139 = vadd.f32 0.0, %v1138
      %v1140 = vpop.f32.mrf.mxu0
      %v1141 = vpop.f32.mrf.mxu0
      %v1142 = vadd.f32 0.0, %v1141
      %v1143 = vpop.f32.mrf.mxu0
      %1144 = vmatprep.mubr.bf16.mxu0 0
      %1145 = vmatmul.mubr.bf16.gmra.mxu0 %v1029
      %v1146 = vpop.f32.mrf.mxu0
      %v1147 = vadd.f32 0.0, %v1146
      %v1148 = vpop.f32.mrf.mxu0
      %v1149 = vpop.f32.mrf.mxu0
      %v1150 = vadd.f32 0.0, %v1149
      %v1151 = vpop.f32.mrf.mxu0
      %1152 = vmatprep.mubr.bf16.mxu0 0
      %1153 = vmatmul.mubr.bf16.gmra.mxu0 %v1030
      %v1154 = vpop.f32.mrf.mxu0
      %v1155 = vadd.f32 0.0, %v1154
      %v1156 = vpop.f32.mrf.mxu0
      %v1157 = vpop.f32.mrf.mxu0
      %v1158 = vadd.f32 0.0, %v1157
      %v1159 = vpop.f32.mrf.mxu0
      %1160 = vmatprep.mubr.bf16.mxu0 0
      %1161 = vmatmul.mubr.bf16.gmra.mxu0 %v1031
      %v1162 = vpop.f32.mrf.mxu0
      %v1163 = vadd.f32 0.0, %v1162
      %v1164 = vpop.f32.mrf.mxu0
      %v1165 = vpop.f32.mrf.mxu0
      %v1166 = vadd.f32 0.0, %v1165
      %v1167 = vpop.f32.mrf.mxu0
      %1168 = vdwg.mxu0
      %1169 = vst.msk [vmem:[#allocation2] sm:$0xff] %vm518, %v1107
      %1170 = vst.msk [vmem:[#allocation2 + $0x8] sm:$0xff] %vm518, %v1110
      %1171 = vst.msk [vmem:[#allocation2 + $0x10] sm:$0xff] %vm518, %v1115
      %1172 = vst.msk [vmem:[#allocation2 + $0x18] sm:$0xff] %vm518, %v1118
      %1173 = vst.msk [vmem:[#allocation2 + $0x20] sm:$0xff] %vm518, %v1123
      %1174 = vst.msk [vmem:[#allocation2 + $0x28] sm:$0xff] %vm518, %v1126
      %1175 = vst.msk [vmem:[#allocation2 + $0x30] sm:$0xff] %vm518, %v1131
      %1176 = vst.msk [vmem:[#allocation2 + $0x38] sm:$0xff] %vm518, %v1134
      %1177 = vst.msk [vmem:[#allocation2 + $0x40] sm:$0xff] %vm518, %v1139
      %1178 = vst.msk [vmem:[#allocation2 + $0x48] sm:$0xff] %vm518, %v1142
      %1179 = vst.msk [vmem:[#allocation2 + $0x50] sm:$0xff] %vm518, %v1147
      %1180 = vst.msk [vmem:[#allocation2 + $0x58] sm:$0xff] %vm518, %v1150
      %1181 = vst.msk [vmem:[#allocation2 + $0x60] sm:$0xff] %vm518, %v1155
      %1182 = vst.msk [vmem:[#allocation2 + $0x68] sm:$0xff] %vm518, %v1158
      %1183 = vst.msk [vmem:[#allocation2 + $0x70] sm:$0xff] %vm518, %v1163
      %1184 = vst.msk [vmem:[#allocation2 + $0x78] sm:$0xff] %vm518, %v1166
      %1185 = vrot.lane.b32.xlu0 %v502, 104
      %v1186 = vpop.permute.xlu0 %1185
      %1187 = vrot.lane.b32.xlu0 %v503, 104
      %v1188 = vpop.permute.xlu0 %1187
      %1189 = vrot.lane.b32.xlu0 %v504, 104
      %v1190 = vpop.permute.xlu0 %1189
      %1191 = vrot.lane.b32.xlu0 %v505, 104
      %v1192 = vpop.permute.xlu0 %1191
      %1193 = vrot.lane.b32.xlu0 %v506, 104
      %v1194 = vpop.permute.xlu0 %1193
      %1195 = vrot.lane.b32.xlu0 %v507, 104
      %v1196 = vpop.permute.xlu0 %1195
      %1197 = vrot.lane.b32.xlu0 %v508, 104
      %v1198 = vpop.permute.xlu0 %1197
      %1199 = vrot.lane.b32.xlu0 %v509, 104
      %v1200 = vpop.permute.xlu0 %1199
      %1201 = vrot.lane.b32.xlu0 %v510, 104
      %v1202 = vpop.permute.xlu0 %1201
      %1203 = vrot.lane.b32.xlu0 %v511, 104
      %v1204 = vpop.permute.xlu0 %1203
      %1205 = vrot.lane.b32.xlu0 %v512, 104
      %v1206 = vpop.permute.xlu0 %1205
      %1207 = vrot.lane.b32.xlu0 %v513, 104
      %v1208 = vpop.permute.xlu0 %1207
      %1209 = vrot.lane.b32.xlu0 %v514, 104
      %v1210 = vpop.permute.xlu0 %1209
      %1211 = vrot.lane.b32.xlu0 %v515, 104
      %v1212 = vpop.permute.xlu0 %1211
      %1213 = vrot.lane.b32.xlu0 %v516, 104
      %v1214 = vpop.permute.xlu0 %1213
      %1215 = vrot.lane.b32.xlu0 %v517, 104
      %v1216 = vpop.permute.xlu0 %1215
      %v1233 = vsel %vm518, %v1186, 0.0
      %1234 = vadd.xlane.f32.xlu0 %v1233
      %v1235 = vpop.xlane.xlu0 %1234
      %v1236 = vsel %vm518, %v1188, 0.0
      %1237 = vadd.xlane.f32.xlu0 %v1236
      %v1238 = vpop.xlane.xlu0 %1237
      %v1239 = vsel %vm518, %v1190, 0.0
      %1240 = vadd.xlane.f32.xlu0 %v1239
      %v1241 = vpop.xlane.xlu0 %1240
      %v1242 = vsel %vm518, %v1192, 0.0
      %1243 = vadd.xlane.f32.xlu0 %v1242
      %v1244 = vpop.xlane.xlu0 %1243
      %v1245 = vsel %vm518, %v1194, 0.0
      %1246 = vadd.xlane.f32.xlu0 %v1245
      %v1247 = vpop.xlane.xlu0 %1246
      %v1248 = vsel %vm518, %v1196, 0.0
      %1249 = vadd.xlane.f32.xlu0 %v1248
      %v1250 = vpop.xlane.xlu0 %1249
      %v1251 = vsel %vm518, %v1198, 0.0
      %1252 = vadd.xlane.f32.xlu0 %v1251
      %v1253 = vpop.xlane.xlu0 %1252
      %v1254 = vsel %vm518, %v1200, 0.0
      %1255 = vadd.xlane.f32.xlu0 %v1254
      %v1256 = vpop.xlane.xlu0 %1255
      %v1257 = vsel %vm518, %v1202, 0.0
      %1258 = vadd.xlane.f32.xlu0 %v1257
      %v1259 = vpop.xlane.xlu0 %1258
      %v1260 = vsel %vm518, %v1204, 0.0
      %1261 = vadd.xlane.f32.xlu0 %v1260
      %v1262 = vpop.xlane.xlu0 %1261
      %v1263 = vsel %vm518, %v1206, 0.0
      %1264 = vadd.xlane.f32.xlu0 %v1263
      %v1265 = vpop.xlane.xlu0 %1264
      %v1266 = vsel %vm518, %v1208, 0.0
      %1267 = vadd.xlane.f32.xlu0 %v1266
      %v1268 = vpop.xlane.xlu0 %1267
      %v1269 = vsel %vm518, %v1210, 0.0
      %1270 = vadd.xlane.f32.xlu0 %v1269
      %v1271 = vpop.xlane.xlu0 %1270
      %v1272 = vsel %vm518, %v1212, 0.0
      %1273 = vadd.xlane.f32.xlu0 %v1272
      %v1274 = vpop.xlane.xlu0 %1273
      %v1275 = vsel %vm518, %v1214, 0.0
      %1276 = vadd.xlane.f32.xlu0 %v1275
      %v1277 = vpop.xlane.xlu0 %1276
      %v1278 = vsel %vm518, %v1216, 0.0
      %1279 = vadd.xlane.f32.xlu0 %v1278
      %v1280 = vpop.xlane.xlu0 %1279
      %v1281 = vmax.f32 %v1235, 1e-24
      %v1282 = vmax.f32 %v1238, 1e-24
      %v1283 = vmax.f32 %v1241, 1e-24
      %v1284 = vmax.f32 %v1244, 1e-24
      %v1285 = vmax.f32 %v1247, 1e-24
      %v1286 = vmax.f32 %v1250, 1e-24
      %v1287 = vmax.f32 %v1253, 1e-24
      %v1288 = vmax.f32 %v1256, 1e-24
      %v1289 = vmax.f32 %v1259, 1e-24
      %v1290 = vmax.f32 %v1262, 1e-24
      %v1291 = vmax.f32 %v1265, 1e-24
      %v1292 = vmax.f32 %v1268, 1e-24
      %v1293 = vmax.f32 %v1271, 1e-24
      %v1294 = vmax.f32 %v1274, 1e-24
      %v1295 = vmax.f32 %v1277, 1e-24
      %v1296 = vmax.f32 %v1280, 1e-24
      %v1297 = vrsqrt.pop %v1281
      %v1298 = vrsqrt.pop %v1282
      %v1299 = vrsqrt.pop %v1283
      %v1300 = vrsqrt.pop %v1284
      %v1301 = vrsqrt.pop %v1285
      %v1302 = vrsqrt.pop %v1286
      %v1303 = vrsqrt.pop %v1287
      %v1304 = vrsqrt.pop %v1288
      %v1305 = vrsqrt.pop %v1289
      %v1306 = vrsqrt.pop %v1290
      %v1307 = vrsqrt.pop %v1291
      %v1308 = vrsqrt.pop %v1292
      %v1309 = vrsqrt.pop %v1293
      %v1310 = vrsqrt.pop %v1294
      %v1311 = vrsqrt.pop %v1295
      %v1312 = vrsqrt.pop %v1296
      %v1313 = vmul.f32 %v424, %v1297
      %v1314 = vmul.f32 %v428, %v1298
      %v1315 = vmul.f32 %v434, %v1299
      %v1316 = vmul.f32 %v438, %v1300
      %v1317 = vmul.f32 %v444, %v1301
      %v1318 = vmul.f32 %v448, %v1302
      %v1319 = vmul.f32 %v454, %v1303
      %v1320 = vmul.f32 %v458, %v1304
      %v1321 = vmul.f32 %v464, %v1305
      %v1322 = vmul.f32 %v468, %v1306
      %v1323 = vmul.f32 %v474, %v1307
      %v1324 = vmul.f32 %v478, %v1308
      %v1325 = vmul.f32 %v484, %v1309
      %v1326 = vmul.f32 %v488, %v1310
      %v1327 = vmul.f32 %v494, %v1311
      %v1328 = vmul.f32 %v498, %v1312
      %1329 = vrot.lane.b32.xlu0 %v502, 56
      %v1330 = vpop.permute.xlu0 %1329
      %1331 = vrot.lane.b32.xlu0 %v503, 56
      %v1332 = vpop.permute.xlu0 %1331
      %1333 = vrot.lane.b32.xlu0 %v504, 56
      %v1334 = vpop.permute.xlu0 %1333
      %1335 = vrot.lane.b32.xlu0 %v505, 56
      %v1336 = vpop.permute.xlu0 %1335
      %1337 = vrot.lane.b32.xlu0 %v506, 56
      %v1338 = vpop.permute.xlu0 %1337
      %1339 = vrot.lane.b32.xlu0 %v507, 56
      %v1340 = vpop.permute.xlu0 %1339
      %1341 = vrot.lane.b32.xlu0 %v508, 56
      %v1342 = vpop.permute.xlu0 %1341
      %1343 = vrot.lane.b32.xlu0 %v509, 56
      %v1344 = vpop.permute.xlu0 %1343
      %1345 = vrot.lane.b32.xlu0 %v510, 56
      %v1346 = vpop.permute.xlu0 %1345
      %1347 = vrot.lane.b32.xlu0 %v511, 56
      %v1348 = vpop.permute.xlu0 %1347
      %1349 = vrot.lane.b32.xlu0 %v512, 56
      %v1350 = vpop.permute.xlu0 %1349
      %1351 = vrot.lane.b32.xlu0 %v513, 56
      %v1352 = vpop.permute.xlu0 %1351
      %1353 = vrot.lane.b32.xlu0 %v514, 56
      %v1354 = vpop.permute.xlu0 %1353
      %1355 = vrot.lane.b32.xlu0 %v515, 56
      %v1356 = vpop.permute.xlu0 %1355
      %1357 = vrot.lane.b32.xlu0 %v516, 56
      %v1358 = vpop.permute.xlu0 %1357
      %1359 = vrot.lane.b32.xlu0 %v517, 56
      %v1360 = vpop.permute.xlu0 %1359
      %v1377 = vsel %vm518, %v1330, 0.0
      %1378 = vadd.xlane.f32.xlu0 %v1377
      %v1379 = vpop.xlane.xlu0 %1378
      %v1380 = vsel %vm518, %v1332, 0.0
      %1381 = vadd.xlane.f32.xlu0 %v1380
      %v1382 = vpop.xlane.xlu0 %1381
      %v1383 = vsel %vm518, %v1334, 0.0
      %1384 = vadd.xlane.f32.xlu0 %v1383
      %v1385 = vpop.xlane.xlu0 %1384
      %v1386 = vsel %vm518, %v1336, 0.0
      %1387 = vadd.xlane.f32.xlu0 %v1386
      %v1388 = vpop.xlane.xlu0 %1387
      %v1389 = vsel %vm518, %v1338, 0.0
      %1390 = vadd.xlane.f32.xlu0 %v1389
      %v1391 = vpop.xlane.xlu0 %1390
      %v1392 = vsel %vm518, %v1340, 0.0
      %1393 = vadd.xlane.f32.xlu0 %v1392
      %v1394 = vpop.xlane.xlu0 %1393
      %v1395 = vsel %vm518, %v1342, 0.0
      %1396 = vadd.xlane.f32.xlu0 %v1395
      %v1397 = vpop.xlane.xlu0 %1396
      %v1398 = vsel %vm518, %v1344, 0.0
      %1399 = vadd.xlane.f32.xlu0 %v1398
      %v1400 = vpop.xlane.xlu0 %1399
      %v1401 = vsel %vm518, %v1346, 0.0
      %1402 = vadd.xlane.f32.xlu0 %v1401
      %v1403 = vpop.xlane.xlu0 %1402
      %v1404 = vsel %vm518, %v1348, 0.0
      %1405 = vadd.xlane.f32.xlu0 %v1404
      %v1406 = vpop.xlane.xlu0 %1405
      %v1407 = vsel %vm518, %v1350, 0.0
      %1408 = vadd.xlane.f32.xlu0 %v1407
      %v1409 = vpop.xlane.xlu0 %1408
      %v1410 = vsel %vm518, %v1352, 0.0
      %1411 = vadd.xlane.f32.xlu0 %v1410
      %v1412 = vpop.xlane.xlu0 %1411
      %v1413 = vsel %vm518, %v1354, 0.0
      %1414 = vadd.xlane.f32.xlu0 %v1413
      %v1415 = vpop.xlane.xlu0 %1414
      %v1416 = vsel %vm518, %v1356, 0.0
      %1417 = vadd.xlane.f32.xlu0 %v1416
      %v1418 = vpop.xlane.xlu0 %1417
      %v1419 = vsel %vm518, %v1358, 0.0
      %1420 = vadd.xlane.f32.xlu0 %v1419
      %v1421 = vpop.xlane.xlu0 %1420
      %v1422 = vsel %vm518, %v1360, 0.0
      %1423 = vadd.xlane.f32.xlu0 %v1422
      %v1424 = vpop.xlane.xlu0 %1423
      %v1425 = vmax.f32 %v1379, 1e-24
      %v1426 = vmax.f32 %v1382, 1e-24
      %v1427 = vmax.f32 %v1385, 1e-24
      %v1428 = vmax.f32 %v1388, 1e-24
      %v1429 = vmax.f32 %v1391, 1e-24
      %v1430 = vmax.f32 %v1394, 1e-24
      %v1431 = vmax.f32 %v1397, 1e-24
      %v1432 = vmax.f32 %v1400, 1e-24
      %v1433 = vmax.f32 %v1403, 1e-24
      %v1434 = vmax.f32 %v1406, 1e-24
      %v1435 = vmax.f32 %v1409, 1e-24
      %v1436 = vmax.f32 %v1412, 1e-24
      %v1437 = vmax.f32 %v1415, 1e-24
      %v1438 = vmax.f32 %v1418, 1e-24
      %v1439 = vmax.f32 %v1421, 1e-24
      %v1440 = vmax.f32 %v1424, 1e-24
      %v1441 = vrsqrt.pop %v1425
      %v1442 = vrsqrt.pop %v1426
      %v1443 = vrsqrt.pop %v1427
      %v1444 = vrsqrt.pop %v1428
      %v1445 = vrsqrt.pop %v1429
      %v1446 = vrsqrt.pop %v1430
      %v1447 = vrsqrt.pop %v1431
      %v1448 = vrsqrt.pop %v1432
      %v1449 = vrsqrt.pop %v1433
      %v1450 = vrsqrt.pop %v1434
      %v1451 = vrsqrt.pop %v1435
      %v1452 = vrsqrt.pop %v1436
      %v1453 = vrsqrt.pop %v1437
      %v1454 = vrsqrt.pop %v1438
      %v1455 = vrsqrt.pop %v1439
      %v1456 = vrsqrt.pop %v1440
      %v1457 = vmul.f32 %v424, %v1441
      %v1458 = vmul.f32 %v428, %v1442
      %v1459 = vmul.f32 %v434, %v1443
      %v1460 = vmul.f32 %v438, %v1444
      %v1461 = vmul.f32 %v444, %v1445
      %v1462 = vmul.f32 %v448, %v1446
      %v1463 = vmul.f32 %v454, %v1447
      %v1464 = vmul.f32 %v458, %v1448
      %v1465 = vmul.f32 %v464, %v1449
      %v1466 = vmul.f32 %v468, %v1450
      %v1467 = vmul.f32 %v474, %v1451
      %v1468 = vmul.f32 %v478, %v1452
      %v1469 = vmul.f32 %v484, %v1453
      %v1470 = vmul.f32 %v488, %v1454
      %v1471 = vmul.f32 %v494, %v1455
      %v1472 = vmul.f32 %v498, %v1456
      %v1473 = vpack.c.bf16 %v1314, %v1313
      %v1474 = vpack.c.bf16 %v1316, %v1315
      %v1475 = vpack.c.bf16 %v1318, %v1317
      %v1476 = vpack.c.bf16 %v1320, %v1319
      %v1477 = vpack.c.bf16 %v1322, %v1321
      %v1478 = vpack.c.bf16 %v1324, %v1323
      %v1479 = vpack.c.bf16 %v1326, %v1325
      %v1480 = vpack.c.bf16 %v1328, %v1327
      %v1481 = vpack.c.bf16 %v1458, %v1457
      %v1482 = vpack.c.bf16 %v1460, %v1459
      %v1483 = vpack.c.bf16 %v1462, %v1461
      %v1484 = vpack.c.bf16 %v1464, %v1463
      %v1485 = vpack.c.bf16 %v1466, %v1465
      %v1486 = vpack.c.bf16 %v1468, %v1467
      %v1487 = vpack.c.bf16 %v1470, %v1469
      %v1488 = vpack.c.bf16 %v1472, %v1471
      %1497 = vrot.lane.b32.xlu0 %v1473, 104
      %v1498 = vpop.permute.xlu0 %1497
      %1499 = vrot.lane.b32.xlu0 %v1474, 104
      %v1500 = vpop.permute.xlu0 %1499
      %1501 = vrot.lane.b32.xlu0 %v1475, 104
      %v1502 = vpop.permute.xlu0 %1501
      %1503 = vrot.lane.b32.xlu0 %v1476, 104
      %v1504 = vpop.permute.xlu0 %1503
      %1505 = vrot.lane.b32.xlu0 %v1477, 104
      %v1506 = vpop.permute.xlu0 %1505
      %1507 = vrot.lane.b32.xlu0 %v1478, 104
      %v1508 = vpop.permute.xlu0 %1507
      %1509 = vrot.lane.b32.xlu0 %v1479, 104
      %v1510 = vpop.permute.xlu0 %1509
      %1511 = vrot.lane.b32.xlu0 %v1480, 104
      %v1512 = vpop.permute.xlu0 %1511
      %1521 = vrot.lane.b32.xlu0 %v1481, 56
      %v1522 = vpop.permute.xlu0 %1521
      %1523 = vrot.lane.b32.xlu0 %v1482, 56
      %v1524 = vpop.permute.xlu0 %1523
      %1525 = vrot.lane.b32.xlu0 %v1483, 56
      %v1526 = vpop.permute.xlu0 %1525
      %1527 = vrot.lane.b32.xlu0 %v1484, 56
      %v1528 = vpop.permute.xlu0 %1527
      %1529 = vrot.lane.b32.xlu0 %v1485, 56
      %v1530 = vpop.permute.xlu0 %1529
      %1531 = vrot.lane.b32.xlu0 %v1486, 56
      %v1532 = vpop.permute.xlu0 %1531
      %1533 = vrot.lane.b32.xlu0 %v1487, 56
      %v1534 = vpop.permute.xlu0 %1533
      %1535 = vrot.lane.b32.xlu0 %v1488, 56
      %v1536 = vpop.permute.xlu0 %1535
      %v1538 = vsel %vm518, %v1498, 0
      %v1541 = vsel %vm518, %v1500, 0
      %v1544 = vsel %vm518, %v1502, 0
      %v1547 = vsel %vm518, %v1504, 0
      %v1550 = vsel %vm518, %v1506, 0
      %v1553 = vsel %vm518, %v1508, 0
      %v1556 = vsel %vm518, %v1510, 0
      %v1559 = vsel %vm518, %v1512, 0
      %v1562 = vsel %vm518, %v1522, 0
      %v1565 = vsel %vm518, %v1524, 0
      %v1568 = vsel %vm518, %v1526, 0
      %v1571 = vsel %vm518, %v1528, 0
      %v1574 = vsel %vm518, %v1530, 0
      %v1577 = vsel %vm518, %v1532, 0
      %v1580 = vsel %vm518, %v1534, 0
      %v1583 = vsel %vm518, %v1536, 0
      %1585 = vmatprep.subr.bf16.mxu0 0
      %1586 = vmatpush1.bf16.xpose.msra.mxu0 %v1583
      %1587 = vmatprep.subr.bf16.mxu0 0
      %1588 = vmatpush1.bf16.xpose.msra.mxu0 %v1580
      %1589 = vmatprep.subr.bf16.mxu0 0
      %1590 = vmatpush1.bf16.xpose.msra.mxu0 %v1577
      %1591 = vmatprep.subr.bf16.mxu0 0
      %1592 = vmatpush1.bf16.xpose.msra.mxu0 %v1574
      %1593 = vmatprep.subr.bf16.mxu0 0
      %1594 = vmatpush1.bf16.xpose.msra.mxu0 %v1571
      %1595 = vmatprep.subr.bf16.mxu0 0
      %1596 = vmatpush1.bf16.xpose.msra.mxu0 %v1568
      %1597 = vmatprep.subr.bf16.mxu0 0
      %1598 = vmatpush1.bf16.xpose.msra.mxu0 %v1565
      %1599 = vmatprep.subr.bf16.mxu0 0
      %1600 = vmatpush1.bf16.xpose.msra.mxu0 %v1562
      %1601 = vmatprep.subr.bf16.mxu0 0
      %1602 = vmatpush2.bf16.xpose.msra.mxu0 0
      %1603 = vmatprep.subr.bf16.mxu0 0
      %1604 = vmatpush2.bf16.xpose.msra.mxu0 0
      %1605 = vmatprep.subr.bf16.mxu0 0
      %1606 = vmatpush2.bf16.xpose.msra.mxu0 0
      %1607 = vmatprep.subr.bf16.mxu0 0
      %1608 = vmatpush2.bf16.xpose.msra.mxu0 0
      %1609 = vmatprep.subr.bf16.mxu0 0
      %1610 = vmatpush2.bf16.xpose.msra.mxu0 0
      %1611 = vmatprep.subr.bf16.mxu0 0
      %1612 = vmatpush2.bf16.xpose.msra.mxu0 0
      %1613 = vmatprep.subr.bf16.mxu0 0
      %1614 = vmatpush2.bf16.xpose.msra.mxu0 0
      %1615 = vmatprep.subr.bf16.mxu0 0
      %1616 = vmatpush2.bf16.xpose.msra.mxu0 0
      %1617 = vmatprep.mubr.bf16.mxu0 0
      %1618 = vmatmul.mubr.bf16.gmra.mxu0 %v1538
      %v1619 = vpop.f32.mrf.mxu0
      %v1620 = vadd.f32 0.0, %v1619
      %v1621 = vpop.f32.mrf.mxu0
      %v1622 = vpop.f32.mrf.mxu0
      %v1623 = vadd.f32 0.0, %v1622
      %v1624 = vpop.f32.mrf.mxu0
      %1625 = vmatprep.mubr.bf16.mxu0 0
      %1626 = vmatmul.mubr.bf16.gmra.mxu0 %v1541
      %v1627 = vpop.f32.mrf.mxu0
      %v1628 = vadd.f32 0.0, %v1627
      %v1629 = vpop.f32.mrf.mxu0
      %v1630 = vpop.f32.mrf.mxu0
      %v1631 = vadd.f32 0.0, %v1630
      %v1632 = vpop.f32.mrf.mxu0
      %1633 = vmatprep.mubr.bf16.mxu0 0
      %1634 = vmatmul.mubr.bf16.gmra.mxu0 %v1544
      %v1635 = vpop.f32.mrf.mxu0
      %v1636 = vadd.f32 0.0, %v1635
      %v1637 = vpop.f32.mrf.mxu0
      %v1638 = vpop.f32.mrf.mxu0
      %v1639 = vadd.f32 0.0, %v1638
      %v1640 = vpop.f32.mrf.mxu0
      %1641 = vmatprep.mubr.bf16.mxu0 0
      %1642 = vmatmul.mubr.bf16.gmra.mxu0 %v1547
      %v1643 = vpop.f32.mrf.mxu0
      %v1644 = vadd.f32 0.0, %v1643
      %v1645 = vpop.f32.mrf.mxu0
      %v1646 = vpop.f32.mrf.mxu0
      %v1647 = vadd.f32 0.0, %v1646
      %v1648 = vpop.f32.mrf.mxu0
      %1649 = vmatprep.mubr.bf16.mxu0 0
      %1650 = vmatmul.mubr.bf16.gmra.mxu0 %v1550
      %v1651 = vpop.f32.mrf.mxu0
      %v1652 = vadd.f32 0.0, %v1651
      %v1653 = vpop.f32.mrf.mxu0
      %v1654 = vpop.f32.mrf.mxu0
      %v1655 = vadd.f32 0.0, %v1654
      %v1656 = vpop.f32.mrf.mxu0
      %1657 = vmatprep.mubr.bf16.mxu0 0
      %1658 = vmatmul.mubr.bf16.gmra.mxu0 %v1553
      %v1659 = vpop.f32.mrf.mxu0
      %v1660 = vadd.f32 0.0, %v1659
      %v1661 = vpop.f32.mrf.mxu0
      %v1662 = vpop.f32.mrf.mxu0
      %v1663 = vadd.f32 0.0, %v1662
      %v1664 = vpop.f32.mrf.mxu0
      %1665 = vmatprep.mubr.bf16.mxu0 0
      %1666 = vmatmul.mubr.bf16.gmra.mxu0 %v1556
      %v1667 = vpop.f32.mrf.mxu0
      %v1668 = vadd.f32 0.0, %v1667
      %v1669 = vpop.f32.mrf.mxu0
      %v1670 = vpop.f32.mrf.mxu0
      %v1671 = vadd.f32 0.0, %v1670
      %v1672 = vpop.f32.mrf.mxu0
      %1673 = vmatprep.mubr.bf16.mxu0 0
      %1674 = vmatmul.mubr.bf16.gmra.mxu0 %v1559
      %v1675 = vpop.f32.mrf.mxu0
      %v1676 = vadd.f32 0.0, %v1675
      %v1677 = vpop.f32.mrf.mxu0
      %v1678 = vpop.f32.mrf.mxu0
      %v1679 = vadd.f32 0.0, %v1678
      %v1680 = vpop.f32.mrf.mxu0
      %1681 = vdwg.mxu0
      %s1682 = scalar_lea.vmem %s5, 128
      %v1683 = vld [vmem:[%s1682] sm:$0xff]
      %v1684 = vld [vmem:[%s1682 + $0x8] sm:$0xff]
      %v1685 = vld [vmem:[%s1682 + $0x10] sm:$0xff]
      %v1686 = vld [vmem:[%s1682 + $0x18] sm:$0xff]
      %v1687 = vld [vmem:[%s1682 + $0x20] sm:$0xff]
      %v1688 = vld [vmem:[%s1682 + $0x28] sm:$0xff]
      %v1689 = vld [vmem:[%s1682 + $0x30] sm:$0xff]
      %v1690 = vld [vmem:[%s1682 + $0x38] sm:$0xff]
      %v1691 = vld [vmem:[%s1682 + $0x40] sm:$0xff]
      %v1692 = vld [vmem:[%s1682 + $0x48] sm:$0xff]
      %v1693 = vld [vmem:[%s1682 + $0x50] sm:$0xff]
      %v1694 = vld [vmem:[%s1682 + $0x58] sm:$0xff]
      %v1695 = vld [vmem:[%s1682 + $0x60] sm:$0xff]
      %v1696 = vld [vmem:[%s1682 + $0x68] sm:$0xff]
      %v1697 = vld [vmem:[%s1682 + $0x70] sm:$0xff]
      %v1698 = vld [vmem:[%s1682 + $0x78] sm:$0xff]
      %v1699 = vmul.f32 %v1620, %v1683
      %v1700 = vmul.f32 %v1623, %v1684
      %v1701 = vmul.f32 %v1628, %v1685
      %v1702 = vmul.f32 %v1631, %v1686
      %v1703 = vmul.f32 %v1636, %v1687
      %v1704 = vmul.f32 %v1639, %v1688
      %v1705 = vmul.f32 %v1644, %v1689
      %v1706 = vmul.f32 %v1647, %v1690
      %v1707 = vmul.f32 %v1652, %v1691
      %v1708 = vmul.f32 %v1655, %v1692
      %v1709 = vmul.f32 %v1660, %v1693
      %v1710 = vmul.f32 %v1663, %v1694
      %v1711 = vmul.f32 %v1668, %v1695
      %v1712 = vmul.f32 %v1671, %v1696
      %v1713 = vmul.f32 %v1676, %v1697
      %v1714 = vmul.f32 %v1679, %v1698
      %s1715 = scalar_lea.vmem %s6, 128
      %v1716 = vld [vmem:[%s1715] sm:$0xff]
      %v1717 = vld [vmem:[%s1715 + $0x8] sm:$0xff]
      %v1718 = vld [vmem:[%s1715 + $0x10] sm:$0xff]
      %v1719 = vld [vmem:[%s1715 + $0x18] sm:$0xff]
      %v1720 = vld [vmem:[%s1715 + $0x20] sm:$0xff]
      %v1721 = vld [vmem:[%s1715 + $0x28] sm:$0xff]
      %v1722 = vld [vmem:[%s1715 + $0x30] sm:$0xff]
      %v1723 = vld [vmem:[%s1715 + $0x38] sm:$0xff]
      %v1724 = vld [vmem:[%s1715 + $0x40] sm:$0xff]
      %v1725 = vld [vmem:[%s1715 + $0x48] sm:$0xff]
      %v1726 = vld [vmem:[%s1715 + $0x50] sm:$0xff]
      %v1727 = vld [vmem:[%s1715 + $0x58] sm:$0xff]
      %v1728 = vld [vmem:[%s1715 + $0x60] sm:$0xff]
      %v1729 = vld [vmem:[%s1715 + $0x68] sm:$0xff]
      %v1730 = vld [vmem:[%s1715 + $0x70] sm:$0xff]
      %v1731 = vld [vmem:[%s1715 + $0x78] sm:$0xff]
      %v1732 = vadd.f32 %v1699, %v1716
      %v1733 = vadd.f32 %v1700, %v1717
      %v1734 = vadd.f32 %v1701, %v1718
      %v1735 = vadd.f32 %v1702, %v1719
      %v1736 = vadd.f32 %v1703, %v1720
      %v1737 = vadd.f32 %v1704, %v1721
      %v1738 = vadd.f32 %v1705, %v1722
      %v1739 = vadd.f32 %v1706, %v1723
      %v1740 = vadd.f32 %v1707, %v1724
      %v1741 = vadd.f32 %v1708, %v1725
      %v1742 = vadd.f32 %v1709, %v1726
      %v1743 = vadd.f32 %v1710, %v1727
      %v1744 = vadd.f32 %v1711, %v1728
      %v1745 = vadd.f32 %v1712, %v1729
      %v1746 = vadd.f32 %v1713, %v1730
      %v1747 = vadd.f32 %v1714, %v1731
      %v1748 = vpack.c.bf16 %v1733, %v1732
      %v1749 = vpack.c.bf16 %v1735, %v1734
      %v1750 = vpack.c.bf16 %v1737, %v1736
      %v1751 = vpack.c.bf16 %v1739, %v1738
      %v1752 = vpack.c.bf16 %v1741, %v1740
      %v1753 = vpack.c.bf16 %v1743, %v1742
      %v1754 = vpack.c.bf16 %v1745, %v1744
      %v1755 = vpack.c.bf16 %v1747, %v1746
      %v1756 = vpack.c.bf16 %v430, %v426
      %v1757 = vpack.c.bf16 %v440, %v436
      %v1758 = vpack.c.bf16 %v450, %v446
      %v1759 = vpack.c.bf16 %v460, %v456
      %v1760 = vpack.c.bf16 %v470, %v466
      %v1761 = vpack.c.bf16 %v480, %v476
      %v1762 = vpack.c.bf16 %v490, %v486
      %v1763 = vpack.c.bf16 %v500, %v496
      %1772 = vrot.lane.b32.xlu0 %v1032, 8
      %v1773 = vpop.permute.xlu0 %1772
      %1774 = vrot.lane.b32.xlu0 %v1756, 8
      %v1775 = vpop.permute.xlu0 %1774
      %1776 = vrot.lane.b32.xlu0 %v1033, 8
      %v1777 = vpop.permute.xlu0 %1776
      %1778 = vrot.lane.b32.xlu0 %v1757, 8
      %v1779 = vpop.permute.xlu0 %1778
      %1780 = vrot.lane.b32.xlu0 %v1034, 8
      %v1781 = vpop.permute.xlu0 %1780
      %1782 = vrot.lane.b32.xlu0 %v1758, 8
      %v1783 = vpop.permute.xlu0 %1782
      %1784 = vrot.lane.b32.xlu0 %v1035, 8
      %v1785 = vpop.permute.xlu0 %1784
      %1786 = vrot.lane.b32.xlu0 %v1759, 8
      %v1787 = vpop.permute.xlu0 %1786
      %1788 = vrot.lane.b32.xlu0 %v1036, 8
      %v1789 = vpop.permute.xlu0 %1788
      %1790 = vrot.lane.b32.xlu0 %v1760, 8
      %v1791 = vpop.permute.xlu0 %1790
      %1792 = vrot.lane.b32.xlu0 %v1037, 8
      %v1793 = vpop.permute.xlu0 %1792
      %1794 = vrot.lane.b32.xlu0 %v1761, 8
      %v1795 = vpop.permute.xlu0 %1794
      %1796 = vrot.lane.b32.xlu0 %v1038, 8
      %v1797 = vpop.permute.xlu0 %1796
      %1798 = vrot.lane.b32.xlu0 %v1762, 8
      %v1799 = vpop.permute.xlu0 %1798
      %1800 = vrot.lane.b32.xlu0 %v1039, 8
      %v1801 = vpop.permute.xlu0 %1800
      %1802 = vrot.lane.b32.xlu0 %v1763, 8
      %v1803 = vpop.permute.xlu0 %1802
      %vm1804 = vcmask 64512
      %v1805 = vsel %vm1804, %v1773, %v1775
      %v1806 = vsel %vm1804, %v1777, %v1779
      %v1807 = vsel %vm1804, %v1781, %v1783
      %v1808 = vsel %vm1804, %v1785, %v1787
      %v1809 = vsel %vm1804, %v1789, %v1791
      %v1810 = vsel %vm1804, %v1793, %v1795
      %v1811 = vsel %vm1804, %v1797, %v1799
      %v1812 = vsel %vm1804, %v1801, %v1803
      %1821 = vmatprep.subr.bf16.mxu0 0
      %1822 = vmatpush1.bf16.msra.mxu0 %v1812
      %1823 = vmatprep.subr.bf16.mxu0 0
      %1824 = vmatpush1.bf16.msra.mxu0 %v1811
      %1825 = vmatprep.subr.bf16.mxu0 0
      %1826 = vmatpush1.bf16.msra.mxu0 %v1810
      %1827 = vmatprep.subr.bf16.mxu0 0
      %1828 = vmatpush1.bf16.msra.mxu0 %v1809
      %1829 = vmatprep.subr.bf16.mxu0 0
      %1830 = vmatpush1.bf16.msra.mxu0 %v1808
      %1831 = vmatprep.subr.bf16.mxu0 0
      %1832 = vmatpush1.bf16.msra.mxu0 %v1807
      %1833 = vmatprep.subr.bf16.mxu0 0
      %1834 = vmatpush1.bf16.msra.mxu0 %v1806
      %1835 = vmatprep.subr.bf16.mxu0 0
      %1836 = vmatpush1.bf16.msra.mxu0 %v1805
      %1837 = vmatprep.subr.bf16.mxu0 0
      %1838 = vmatpush2.bf16.msra.mxu0 0
      %1839 = vmatprep.subr.bf16.mxu0 0
      %1840 = vmatpush2.bf16.msra.mxu0 0
      %1841 = vmatprep.subr.bf16.mxu0 0
      %1842 = vmatpush2.bf16.msra.mxu0 0
      %1843 = vmatprep.subr.bf16.mxu0 0
      %1844 = vmatpush2.bf16.msra.mxu0 0
      %1845 = vmatprep.subr.bf16.mxu0 0
      %1846 = vmatpush2.bf16.msra.mxu0 0
      %1847 = vmatprep.subr.bf16.mxu0 0
      %1848 = vmatpush2.bf16.msra.mxu0 0
      %1849 = vmatprep.subr.bf16.mxu0 0
      %1850 = vmatpush2.bf16.msra.mxu0 0
      %1851 = vmatprep.subr.bf16.mxu0 0
      %1852 = vmatpush2.bf16.msra.mxu0 0
      %1853 = vmatprep.mubr.bf16.mxu0 0
      %1854 = vmatmul.mubr.bf16.gmra.mxu0 %v1748
      %v1855 = vpop.f32.mrf.mxu0
      %v1856 = vadd.f32 0.0, %v1855
      %v1857 = vpop.f32.mrf.mxu0
      %v1858 = vpop.f32.mrf.mxu0
      %v1859 = vadd.f32 0.0, %v1858
      %v1860 = vpop.f32.mrf.mxu0
      %1861 = vmatprep.mubr.bf16.mxu0 0
      %1862 = vmatmul.mubr.bf16.gmra.mxu0 %v1749
      %v1863 = vpop.f32.mrf.mxu0
      %v1864 = vadd.f32 0.0, %v1863
      %v1865 = vpop.f32.mrf.mxu0
      %v1866 = vpop.f32.mrf.mxu0
      %v1867 = vadd.f32 0.0, %v1866
      %v1868 = vpop.f32.mrf.mxu0
      %1869 = vmatprep.mubr.bf16.mxu0 0
      %1870 = vmatmul.mubr.bf16.gmra.mxu0 %v1750
      %v1871 = vpop.f32.mrf.mxu0
      %v1872 = vadd.f32 0.0, %v1871
      %v1873 = vpop.f32.mrf.mxu0
      %v1874 = vpop.f32.mrf.mxu0
      %v1875 = vadd.f32 0.0, %v1874
      %v1876 = vpop.f32.mrf.mxu0
      %1877 = vmatprep.mubr.bf16.mxu0 0
      %1878 = vmatmul.mubr.bf16.gmra.mxu0 %v1751
      %v1879 = vpop.f32.mrf.mxu0
      %v1880 = vadd.f32 0.0, %v1879
      %v1881 = vpop.f32.mrf.mxu0
      %v1882 = vpop.f32.mrf.mxu0
      %v1883 = vadd.f32 0.0, %v1882
      %v1884 = vpop.f32.mrf.mxu0
      %1885 = vmatprep.mubr.bf16.mxu0 0
      %1886 = vmatmul.mubr.bf16.gmra.mxu0 %v1752
      %v1887 = vpop.f32.mrf.mxu0
      %v1888 = vadd.f32 0.0, %v1887
      %v1889 = vpop.f32.mrf.mxu0
      %v1890 = vpop.f32.mrf.mxu0
      %v1891 = vadd.f32 0.0, %v1890
      %v1892 = vpop.f32.mrf.mxu0
      %1893 = vmatprep.mubr.bf16.mxu0 0
      %1894 = vmatmul.mubr.bf16.gmra.mxu0 %v1753
      %v1895 = vpop.f32.mrf.mxu0
      %v1896 = vadd.f32 0.0, %v1895
      %v1897 = vpop.f32.mrf.mxu0
      %v1898 = vpop.f32.mrf.mxu0
      %v1899 = vadd.f32 0.0, %v1898
      %v1900 = vpop.f32.mrf.mxu0
      %1901 = vmatprep.mubr.bf16.mxu0 0
      %1902 = vmatmul.mubr.bf16.gmra.mxu0 %v1754
      %v1903 = vpop.f32.mrf.mxu0
      %v1904 = vadd.f32 0.0, %v1903
      %v1905 = vpop.f32.mrf.mxu0
      %v1906 = vpop.f32.mrf.mxu0
      %v1907 = vadd.f32 0.0, %v1906
      %v1908 = vpop.f32.mrf.mxu0
      %1909 = vmatprep.mubr.bf16.mxu0 0
      %1910 = vmatmul.mubr.bf16.gmra.mxu0 %v1755
      %v1911 = vpop.f32.mrf.mxu0
      %v1912 = vadd.f32 0.0, %v1911
      %v1913 = vpop.f32.mrf.mxu0
      %v1914 = vpop.f32.mrf.mxu0
      %v1915 = vadd.f32 0.0, %v1914
      %v1916 = vpop.f32.mrf.mxu0
      %1917 = vdwg.mxu0
      %1934 = vrot.lane.b32.xlu0 %v1856, 24
      %v1935 = vpop.permute.xlu0 %1934
      %1936 = vrot.lane.b32.xlu0 %v1859, 24
      %v1937 = vpop.permute.xlu0 %1936
      %1938 = vrot.lane.b32.xlu0 %v1864, 24
      %v1939 = vpop.permute.xlu0 %1938
      %1940 = vrot.lane.b32.xlu0 %v1867, 24
      %v1941 = vpop.permute.xlu0 %1940
      %1942 = vrot.lane.b32.xlu0 %v1872, 24
      %v1943 = vpop.permute.xlu0 %1942
      %1944 = vrot.lane.b32.xlu0 %v1875, 24
      %v1945 = vpop.permute.xlu0 %1944
      %1946 = vrot.lane.b32.xlu0 %v1880, 24
      %v1947 = vpop.permute.xlu0 %1946
      %1948 = vrot.lane.b32.xlu0 %v1883, 24
      %v1949 = vpop.permute.xlu0 %1948
      %1950 = vrot.lane.b32.xlu0 %v1888, 24
      %v1951 = vpop.permute.xlu0 %1950
      %1952 = vrot.lane.b32.xlu0 %v1891, 24
      %v1953 = vpop.permute.xlu0 %1952
      %1954 = vrot.lane.b32.xlu0 %v1896, 24
      %v1955 = vpop.permute.xlu0 %1954
      %1956 = vrot.lane.b32.xlu0 %v1899, 24
      %v1957 = vpop.permute.xlu0 %1956
      %1958 = vrot.lane.b32.xlu0 %v1904, 24
      %v1959 = vpop.permute.xlu0 %1958
      %1960 = vrot.lane.b32.xlu0 %v1907, 24
      %v1961 = vpop.permute.xlu0 %1960
      %1962 = vrot.lane.b32.xlu0 %v1912, 24
      %v1963 = vpop.permute.xlu0 %1962
      %1964 = vrot.lane.b32.xlu0 %v1915, 24
      %v1965 = vpop.permute.xlu0 %1964
      %vm1982 = vcmask 392384
      %1983 = vst.msk [vmem:[#allocation2] sm:$0xff] %vm1982, %v1935
      %1984 = vst.msk [vmem:[#allocation2 + $0x8] sm:$0xff] %vm1982, %v1937
      %1985 = vst.msk [vmem:[#allocation2 + $0x10] sm:$0xff] %vm1982, %v1939
      %1986 = vst.msk [vmem:[#allocation2 + $0x18] sm:$0xff] %vm1982, %v1941
      %1987 = vst.msk [vmem:[#allocation2 + $0x20] sm:$0xff] %vm1982, %v1943
      %1988 = vst.msk [vmem:[#allocation2 + $0x28] sm:$0xff] %vm1982, %v1945
      %1989 = vst.msk [vmem:[#allocation2 + $0x30] sm:$0xff] %vm1982, %v1947
      %1990 = vst.msk [vmem:[#allocation2 + $0x38] sm:$0xff] %vm1982, %v1949
      %1991 = vst.msk [vmem:[#allocation2 + $0x40] sm:$0xff] %vm1982, %v1951
      %1992 = vst.msk [vmem:[#allocation2 + $0x48] sm:$0xff] %vm1982, %v1953
      %1993 = vst.msk [vmem:[#allocation2 + $0x50] sm:$0xff] %vm1982, %v1955
      %1994 = vst.msk [vmem:[#allocation2 + $0x58] sm:$0xff] %vm1982, %v1957
      %1995 = vst.msk [vmem:[#allocation2 + $0x60] sm:$0xff] %vm1982, %v1959
      %1996 = vst.msk [vmem:[#allocation2 + $0x68] sm:$0xff] %vm1982, %v1961
      %1997 = vst.msk [vmem:[#allocation2 + $0x70] sm:$0xff] %vm1982, %v1963
      %1998 = vst.msk [vmem:[#allocation2 + $0x78] sm:$0xff] %vm1982, %v1965
      %v1999 = vld [vmem:[#allocation2] sm:$0xff]
      %v2000 = vld [vmem:[#allocation2 + $0x8] sm:$0xff]
      %v2001 = vld [vmem:[#allocation2 + $0x10] sm:$0xff]
      %v2002 = vld [vmem:[#allocation2 + $0x18] sm:$0xff]
      %v2003 = vld [vmem:[#allocation2 + $0x20] sm:$0xff]
      %v2004 = vld [vmem:[#allocation2 + $0x28] sm:$0xff]
      %v2005 = vld [vmem:[#allocation2 + $0x30] sm:$0xff]
      %v2006 = vld [vmem:[#allocation2 + $0x38] sm:$0xff]
      %v2007 = vld [vmem:[#allocation2 + $0x40] sm:$0xff]
      %v2008 = vld [vmem:[#allocation2 + $0x48] sm:$0xff]
      %v2009 = vld [vmem:[#allocation2 + $0x50] sm:$0xff]
      %v2010 = vld [vmem:[#allocation2 + $0x58] sm:$0xff]
      %v2011 = vld [vmem:[#allocation2 + $0x60] sm:$0xff]
      %v2012 = vld [vmem:[#allocation2 + $0x68] sm:$0xff]
      %v2013 = vld [vmem:[#allocation2 + $0x70] sm:$0xff]
      %v2014 = vld [vmem:[#allocation2 + $0x78] sm:$0xff]
      %v2015 = vpack.c.bf16 %v2000, %v1999
      %v2016 = vpack.c.bf16 %v2002, %v2001
      %v2017 = vpack.c.bf16 %v2004, %v2003
      %v2018 = vpack.c.bf16 %v2006, %v2005
      %v2019 = vpack.c.bf16 %v2008, %v2007
      %v2020 = vpack.c.bf16 %v2010, %v2009
      %v2021 = vpack.c.bf16 %v2012, %v2011
      %v2022 = vpack.c.bf16 %v2014, %v2013
      %v2023 = vld [vmem:[%s3] sm:$0xf]
      %v2024 = vld [vmem:[%s3 + $0x4] sm:$0xf]
      %v2025 = vld [vmem:[%s3 + $0x8] sm:$0xf]
      %v2026 = vld [vmem:[%s3 + $0xc] sm:$0xf]
      %v2027 = vld [vmem:[%s3 + $0x10] sm:$0xf]
      %v2028 = vld [vmem:[%s3 + $0x14] sm:$0xf]
      %v2029 = vld [vmem:[%s4] sm:$0x1]
      %v2031 = vlaneseq
      %v2032 = vshrl.u32 %v2031, 7
      %v2033 = vsub.s32 0, %v2032
      %v2034 = vrot.slane %v2029, %v2033
      %v2042 = vunpack.c.l.b16 %v2023
      %v2043 = vunpack.c.l.b16 %v2024
      %v2044 = vunpack.c.l.b16 %v2025
      %v2045 = vunpack.c.l.b16 %v2026
      %v2046 = vunpack.c.l.b16 %v2027
      %v2047 = vunpack.c.l.b16 %v2028
      %v2048 = vpack.c.b16 %v2043, %v2042
      %v2049 = vpack.c.b16 %v2045, %v2044
      %v2050 = vpack.c.b16 %v2047, %v2046
      %vm2054 = vcmask 392192
      %v2056 = vsel %vm2054, %v2015, 0
      %v2059 = vsel %vm2054, %v2016, 0
      %v2062 = vsel %vm2054, %v2017, 0
      %v2065 = vsel %vm2054, %v2018, 0
      %v2068 = vsel %vm2054, %v2019, 0
      %v2071 = vsel %vm2054, %v2020, 0
      %v2074 = vsel %vm2054, %v2021, 0
      %v2077 = vsel %vm2054, %v2022, 0
      %2079 = vmatprep.subr.bf16.mxu0 0
      %2080 = vmatpush1.bf16.msra.mxu0 0
      %2081 = vmatprep.subr.bf16.mxu0 0
      %2082 = vmatpush1.bf16.msra.mxu0 0
      %2083 = vmatprep.subr.bf16.mxu0 0
      %2084 = vmatpush1.bf16.msra.mxu0 0
      %2085 = vmatprep.subr.bf16.mxu0 0
      %2086 = vmatpush1.bf16.msra.mxu0 0
      %2087 = vmatprep.subr.bf16.mxu0 0
      %2088 = vmatpush1.bf16.msra.mxu0 0
      %2089 = vmatprep.subr.bf16.mxu0 0
      %2090 = vmatpush1.bf16.msra.mxu0 %v2050
      %2091 = vmatprep.subr.bf16.mxu0 0
      %2092 = vmatpush1.bf16.msra.mxu0 %v2049
      %2093 = vmatprep.subr.bf16.mxu0 0
      %2094 = vmatpush1.bf16.msra.mxu0 %v2048
      %2095 = vmatprep.subr.bf16.mxu0 0
      %2096 = vmatpush2.bf16.msra.mxu0 0
      %2097 = vmatprep.subr.bf16.mxu0 0
      %2098 = vmatpush2.bf16.msra.mxu0 0
      %2099 = vmatprep.subr.bf16.mxu0 0
      %2100 = vmatpush2.bf16.msra.mxu0 0
      %2101 = vmatprep.subr.bf16.mxu0 0
      %2102 = vmatpush2.bf16.msra.mxu0 0
      %2103 = vmatprep.subr.bf16.mxu0 0
      %2104 = vmatpush2.bf16.msra.mxu0 0
      %2105 = vmatprep.subr.bf16.mxu0 0
      %2106 = vmatpush2.bf16.msra.mxu0 0
      %2107 = vmatprep.subr.bf16.mxu0 0
      %2108 = vmatpush2.bf16.msra.mxu0 0
      %2109 = vmatprep.subr.bf16.mxu0 0
      %2110 = vmatpush2.bf16.msra.mxu0 0
      %2111 = vmatprep.mubr.bf16.mxu0 0
      %2112 = vmatmul.mubr.bf16.gmra.mxu0 %v2056
      %v2113 = vpop.f32.mrf.mxu0
      %v2114 = vadd.f32 %v2034, %v2113
      %v2115 = vpop.f32.mrf.mxu0
      %v2116 = vpop.f32.mrf.mxu0
      %v2117 = vadd.f32 %v2034, %v2116
      %v2118 = vpop.f32.mrf.mxu0
      %2119 = vmatprep.mubr.bf16.mxu0 0
      %2120 = vmatmul.mubr.bf16.gmra.mxu0 %v2059
      %v2121 = vpop.f32.mrf.mxu0
      %v2122 = vadd.f32 %v2034, %v2121
      %v2123 = vpop.f32.mrf.mxu0
      %v2124 = vpop.f32.mrf.mxu0
      %v2125 = vadd.f32 %v2034, %v2124
      %v2126 = vpop.f32.mrf.mxu0
      %2127 = vmatprep.mubr.bf16.mxu0 0
      %2128 = vmatmul.mubr.bf16.gmra.mxu0 %v2062
      %v2129 = vpop.f32.mrf.mxu0
      %v2130 = vadd.f32 %v2034, %v2129
      %v2131 = vpop.f32.mrf.mxu0
      %v2132 = vpop.f32.mrf.mxu0
      %v2133 = vadd.f32 %v2034, %v2132
      %v2134 = vpop.f32.mrf.mxu0
      %2135 = vmatprep.mubr.bf16.mxu0 0
      %2136 = vmatmul.mubr.bf16.gmra.mxu0 %v2065
      %v2137 = vpop.f32.mrf.mxu0
      %v2138 = vadd.f32 %v2034, %v2137
      %v2139 = vpop.f32.mrf.mxu0
      %v2140 = vpop.f32.mrf.mxu0
      %v2141 = vadd.f32 %v2034, %v2140
      %v2142 = vpop.f32.mrf.mxu0
      %2143 = vmatprep.mubr.bf16.mxu0 0
      %2144 = vmatmul.mubr.bf16.gmra.mxu0 %v2068
      %v2145 = vpop.f32.mrf.mxu0
      %v2146 = vadd.f32 %v2034, %v2145
      %v2147 = vpop.f32.mrf.mxu0
      %v2148 = vpop.f32.mrf.mxu0
      %v2149 = vadd.f32 %v2034, %v2148
      %v2150 = vpop.f32.mrf.mxu0
      %2151 = vmatprep.mubr.bf16.mxu0 0
      %2152 = vmatmul.mubr.bf16.gmra.mxu0 %v2071
      %v2153 = vpop.f32.mrf.mxu0
      %v2154 = vadd.f32 %v2034, %v2153
      %v2155 = vpop.f32.mrf.mxu0
      %v2156 = vpop.f32.mrf.mxu0
      %v2157 = vadd.f32 %v2034, %v2156
      %v2158 = vpop.f32.mrf.mxu0
      %2159 = vmatprep.mubr.bf16.mxu0 0
      %2160 = vmatmul.mubr.bf16.gmra.mxu0 %v2074
      %v2161 = vpop.f32.mrf.mxu0
      %v2162 = vadd.f32 %v2034, %v2161
      %v2163 = vpop.f32.mrf.mxu0
      %v2164 = vpop.f32.mrf.mxu0
      %v2165 = vadd.f32 %v2034, %v2164
      %v2166 = vpop.f32.mrf.mxu0
      %2167 = vmatprep.mubr.bf16.mxu0 0
      %2168 = vmatmul.mubr.bf16.gmra.mxu0 %v2077
      %v2169 = vpop.f32.mrf.mxu0
      %v2170 = vadd.f32 %v2034, %v2169
      %v2171 = vpop.f32.mrf.mxu0
      %v2172 = vpop.f32.mrf.mxu0
      %v2173 = vadd.f32 %v2034, %v2172
      %v2174 = vpop.f32.mrf.mxu0
      %2175 = vdwg.mxu0
      %2176 = vst.msk [vmem:[%s280] sm:$0xff] %vm357, %v2114
      %2177 = vst.msk [vmem:[%s280 + $0x8] sm:$0xff] %vm357, %v2117
      %2178 = vst.msk [vmem:[%s280 + $0x10] sm:$0xff] %vm357, %v2122
      %2179 = vst.msk [vmem:[%s280 + $0x18] sm:$0xff] %vm357, %v2125
      %2180 = vst.msk [vmem:[%s280 + $0x20] sm:$0xff] %vm357, %v2130
      %2181 = vst.msk [vmem:[%s280 + $0x28] sm:$0xff] %vm357, %v2133
      %2182 = vst.msk [vmem:[%s280 + $0x30] sm:$0xff] %vm357, %v2138
      %2183 = vst.msk [vmem:[%s280 + $0x38] sm:$0xff] %vm357, %v2141
      %2184 = vst.msk [vmem:[%s280 + $0x40] sm:$0xff] %vm357, %v2146
      %2185 = vst.msk [vmem:[%s280 + $0x48] sm:$0xff] %vm357, %v2149
      %2186 = vst.msk [vmem:[%s280 + $0x50] sm:$0xff] %vm357, %v2154
      %2187 = vst.msk [vmem:[%s280 + $0x58] sm:$0xff] %vm357, %v2157
      %2188 = vst.msk [vmem:[%s280 + $0x60] sm:$0xff] %vm357, %v2162
      %2189 = vst.msk [vmem:[%s280 + $0x68] sm:$0xff] %vm357, %v2165
      %2190 = vst.msk [vmem:[%s280 + $0x70] sm:$0xff] %vm357, %v2170
      %2191 = vst.msk [vmem:[%s280 + $0x78] sm:$0xff] %vm357, %v2173
      %s2192 = smul.u32 16, %s18
      %p2193 = scmp.lt.s32.totalorder %s2192, 127
      %s2194 = scalar_select %p2193, %s2192, 127
      %s2195 = smul.addr %s2194, 8
      %s2196 = scalar_lea.vmem %s7, %s2195
      // Predicated region
      $region49: #{window_msa_forward.1} parent=47 // pred_check
        %p2197 = pneg %p188
      $region50: #{window_msa_forward.1} parent=47 // pred_check_branch
        %2199 = sbr.rel (%p2197) target = $region52
      $region51: #{window_msa_forward.1} parent=47 // pred_region
        %s2200 = smul.u32 16, %s18
      $region52: #{window_msa_forward.1} parent=47 // pred_fallthru
        _
    $region48: #{window_msa_forward.1} parent=5 // pred_fallthru
      _
    %p2201 = scmp.le.s32.totalorder 2, %s13
    // Predicated region
    $region53: #{window_msa_forward.1} parent=5 // pred_check
      %p2202 = pneg %p2201
    $region54: #{window_msa_forward.1} parent=5 // pred_check_branch
      %2204 = sbr.rel (%p2202) target = $region56
    $region55: #{window_msa_forward.1} parent=5 // pred_region
      %s2205 = ssub.s32 %s13, 2
      // Predicated region
      $region57: #{window_msa_forward.1} parent=55 // pred_check
        %p2206 = pneg %p194
      $region58: #{window_msa_forward.1} parent=55 // pred_check_branch
        %2208 = sbr.rel (%p2206) target = $region60
      $region59: #{window_msa_forward.1} parent=55 // pred_region
        %s2209 = smul.u32 16, %s19
        %p2210 = scmp.lt.s32.totalorder %s2209, 127
        %s2211 = scalar_select %p2210, %s2209, 127
        %s2212 = smul.addr %s2211, 8
        %s2213 = scalar_lea.vmem %s7, %s2212
      $region60: #{window_msa_forward.1} parent=55 // pred_fallthru
        _
    $region56: #{window_msa_forward.1} parent=5 // pred_fallthru
      _
  $region6: #{window_msa_forward.1} parent=0 // loop_footer
    %s17 = sadd.s32 1, %s13
  $region7: #{window_msa_forward.1} parent=0 // loop_footer_branch
    %12 = sbr.rel target = $region3
  $region8: #{window_msa_forward.1} parent=0 // loop_exit
    _

</llo_original>
